<compile_context>
chip_gen: v7x
topology: tpu7x:2x2x1
jax: 0.10.0
libtpu: 0.0.40
codegen_flags: <defaults>
</compile_context>

<pallas_src>
import functools

import jax
import jax.numpy as jnp
from jax.experimental import pallas as pl
from jax.experimental.pallas import tpu as pltpu

_EPS = 1e-5


# ---------------------------------------------------------------------------
# Kernel
# ---------------------------------------------------------------------------
def upsampling_bottleneck_kernel(x_ref, r_ref, grp_ref, wa_ref, ba_ref, wt_ref, b2_ref,
                                 w3_ref, b3_ref, prelu_ref, o_ref, *, cinter, op):
    a1 = prelu_ref[0]          # PReLU of ext stage 1
    a2 = prelu_ref[1]          # PReLU of ext stage 2
    a3 = prelu_ref[2]          # final PReLU

    x = x_ref[0]                                           # (TM, Cin) bf16

    # stage 1 (fused): [ext 1x1 conv | main 1x1 conv], BN scales folded into W_A.
    # bf16 x bf16 -> f32 accumulate on the MXU.
    y = jnp.dot(x, wa_ref[...], preferred_element_type=jnp.float32) + ba_ref[...]
    t = y[:, :cinter]
    t = jnp.where(t >= 0.0, t, a1 * t)                    # PReLU (f32)
    up = y[:, cinter:]                                    # (TM, Op) main branch, pre-unpool

    # stage 2 (fused): ConvTranspose2d(2,2,stride 2) == one matmul for all 4 sub-pixels
    e = jnp.dot(t.astype(jnp.bfloat16), wt_ref[...],
                preferred_element_type=jnp.float32) + b2_ref[...]
    e = jnp.where(e >= 0.0, e, a2 * e)                    # (TM, 4*Cinter) f32

    # stage 3: final 1x1 conv as block-diagonal matmul (Dropout2d == identity in eval)
    ext = jnp.dot(e.astype(jnp.bfloat16), w3_ref[...],
                  preferred_element_type=jnp.float32) + b3_ref[...]  # (TM, 4*Op)

    # MaxUnpool2d(2): lane group k receives `up` iff the recorded sub-pixel id equals k.
    up4 = jnp.tile(up, (1, 4))                            # (TM, 4*Op)
    r4 = jnp.tile(r_ref[0].astype(jnp.int32), (1, 4))     # (TM, 4*Op) int32
    out = jnp.where(r4 == grp_ref[...], up4, 0.0) + ext   # grp row broadcasts over rows
    o_ref[0] = jnp.where(out >= 0.0, out, a3 * out).astype(jnp.bfloat16)  # lane-dense bf16 store


# ---------------------------------------------------------------------------
# Parameter folding / packing
# ---------------------------------------------------------------------------
def _round_up(x, m):
    return ((x + m - 1) // m) * m


def _fold_bn(bn):
    g, b, m, v = bn
    s = g / jnp.sqrt(v + _EPS)
    return s.astype(jnp.float32), (b - m * s).astype(jnp.float32)


def pack_params(raw):
    wconv_pt, w1_pt, wt_pt, w3_pt = raw["wconv_pt"], raw["w1_pt"], raw["wt_pt"], raw["w3_pt"]
    cout, cin = wconv_pt.shape
    cinter = w1_pt.shape[0]
    op = _round_up(cout, 32)            # 4*op is a multiple of 128 -> unmasked output stores

    s0, b0 = _fold_bn(raw["bn0"])
    s1, b1 = _fold_bn(raw["bn1"])
    s2, b2 = _fold_bn(raw["bn2"])
    s3, b3 = _fold_bn(raw["bn3"])

    # stage 1: [w1 | w_conv], BN scales folded into columns; main part padded to op
    w1_f = w1_pt.T * s1[None, :]                                         # (Cin, Cinter)
    wc_f = jnp.pad(wconv_pt.T * s0[None, :], ((0, 0), (0, op - cout)))   # (Cin, op)
    w_a = jnp.concatenate([w1_f, wc_f], axis=1).astype(jnp.bfloat16)
    b_a = jnp.concatenate([b1, jnp.pad(b0, (0, op - cout))])[None, :].astype(jnp.float32)

    # stage 2: the 4 (di, dj) ConvTranspose sub-matrices concatenated along lanes
    wt_cat = jnp.concatenate(
        [wt_pt[:, :, k // 2, k % 2] * s2[None, :] for k in range(4)], axis=1
    ).astype(jnp.bfloat16)                                               # (Cinter, 4*Cinter)
    b2_cat = jnp.tile(b2, 4)[None, :].astype(jnp.float32)

    # stage 3: final 1x1 conv as block-diagonal matrix, each block padded to op columns
    w3_f = jnp.pad(w3_pt.T * s3[None, :], ((0, 0), (0, op - cout)))      # (Cinter, op)
    w3_bd = jnp.zeros((4 * cinter, 4 * op), jnp.float32)
    for k in range(4):
        w3_bd = w3_bd.at[k * cinter:(k + 1) * cinter, k * op:(k + 1) * op].set(w3_f)
    w3_bd = w3_bd.astype(jnp.bfloat16)
    b3_cat = jnp.tile(jnp.pad(b3, (0, op - cout)), 4)[None, :].astype(jnp.float32)

    return dict(w_a=w_a, b_a=b_a, wt=wt_cat, b2=b2_cat, w3=w3_bd, b3=b3_cat,
                prelu=raw["prelu"].astype(jnp.float32),
                cin=int(cin), cinter=int(cinter), cout=int(cout), op=int(op))


# ---------------------------------------------------------------------------
# Wrapper
# ---------------------------------------------------------------------------
def upsampling_bottleneck(x, max_indices, packed, *, row_tile_cap=512):
    """x: (N, Cin, H, W) f32; max_indices: (N, Cout, H, W) int32 (MaxPool2d(2,2) indices).

    row_tile_cap: 512 is safe on all generations; 1024 is a reasonable choice on v6e/v7x.
    """
    N, Cin, H, W = x.shape
    cinter, cout, op = packed["cinter"], packed["cout"], packed["op"]
    HW = H * W

    # channels-last; bf16 halves HBM traffic of the dominant activation tensor
    x_p = jnp.transpose(x, (0, 2, 3, 1)).reshape(N, HW, Cin).astype(jnp.bfloat16)

    # 2-bit sub-pixel offset r = 2*di + dj from the flat MaxPool2d indices (no div in kernel).
    # Assumes MaxPool2d(kernel=2, stride=2, no padding / ceil_mode), i.e. each index lies in
    # its own 2x2 block of the (2H, 2W) plane.
    ii = jnp.arange(H, dtype=jnp.int32)[:, None]
    jj = jnp.arange(W, dtype=jnp.int32)[None, :]
    base = (2 * ii) * (2 * W) + 2 * jj                                   # (H, W)
    off = max_indices.astype(jnp.int32) - base[None, None]
    di = off // (2 * W)
    dj = off - di * (2 * W)
    r = (2 * di + dj).astype(jnp.int8)                                   # values 0..3, int8 transport
    r_p = jnp.transpose(r, (0, 2, 3, 1)).reshape(N, HW, cout)
    r_p = jnp.pad(r_p, ((0, 0), (0, 0), (0, op - cout)), constant_values=4)  # pad never matches

    # Row tiling: fixed TM (multiple of 32 for int8/bf16 sublane packing), cdiv-style grid
    # with the HW axis padded so every tile is full-width and stores stay unmasked.
    TM = min(row_tile_cap, _round_up(HW, 32))
    HWp = _round_up(HW, TM)
    if HWp != HW:
        x_p = jnp.pad(x_p, ((0, 0), (0, HWp - HW), (0, 0)))
        r_p = jnp.pad(r_p, ((0, 0), (0, HWp - HW), (0, 0)), constant_values=4)
    grid = (N, HWp // TM)

    # Precomputed lane-group id row (grid-invariant), replaces per-tile iota/compare chain.
    grp = (jnp.arange(4 * op, dtype=jnp.int32) // op).reshape(1, 4 * op)

    kernel = functools.partial(upsampling_bottleneck_kernel, cinter=cinter, op=op)

    def rep(arr):  # replicated weights / biases (all 2-D)
        return pl.BlockSpec(arr.shape, lambda n, m: (0, 0))

    in_specs = [
        pl.BlockSpec((1, TM, Cin), lambda n, m: (n, m, 0)),
        pl.BlockSpec((1, TM, op), lambda n, m: (n, m, 0)),
        rep(grp),
        rep(packed["w_a"]), rep(packed["b_a"]),
        rep(packed["wt"]), rep(packed["b2"]),
        rep(packed["w3"]), rep(packed["b3"]),
        pl.BlockSpec(memory_space=pltpu.MemorySpace.SMEM),
    ]
    out_spec = pl.BlockSpec((1, TM, 4 * op), lambda n, m: (n, m, 0))

    # Advisory cost estimate for XLA scheduling around the NCHW <-> channels-last transposes.
    flops = 2 * N * HWp * (Cin * (cinter + op) + cinter * 4 * cinter + 4 * cinter * 4 * op)
    bytes_accessed = (N * HWp * Cin * 2          # x bf16
                      + N * HWp * op * 1         # r int8
                      + N * HWp * 4 * op * 2     # out bf16
                      + 2 * (packed["w_a"].size + packed["wt"].size + packed["w3"].size)
                      + 4 * (packed["b_a"].size + packed["b2"].size + packed["b3"].size))
    cost = pl.CostEstimate(flops=int(flops), transcendentals=0,
                           bytes_accessed=int(bytes_accessed))

    out = pl.pallas_call(
        kernel,
        out_shape=jax.ShapeDtypeStruct((N, HWp, 4 * op), jnp.bfloat16),
        grid=grid,
        in_specs=in_specs,
        out_specs=out_spec,
        compiler_params=pltpu.CompilerParams(
            dimension_semantics=("parallel", "parallel"),
            vmem_limit_bytes=32 * 1024 * 1024,   # well under v7x's 64 MiB physical VMEM
        ),
        cost_estimate=cost,
    )(x_p, r_p, grp, packed["w_a"], packed["b_a"], packed["wt"], packed["b2"],
      packed["w3"], packed["b3"], packed["prelu"])

    # (N, HWp, 4*op) -> trim rows -> (N, H, W, di, dj, op) -> drop channel pad -> (N, Cout, 2H, 2W)
    out = out[:, :HW].reshape(N, H, W, 2, 2, op)[..., :cout]
    out = jnp.transpose(out, (0, 5, 1, 3, 2, 4)).reshape(N, cout, 2 * H, 2 * W)
    return out.astype(jnp.float32)


# ---------------------------------------------------------------------------
# Deterministic parameter construction + pure-JAX reference for validation.
# ---------------------------------------------------------------------------
def make_raw_params(key, in_channels, inter_channels, out_channels):
    ks = jax.random.split(key, 8)

    def bn_params(k, c):
        k1, k2, k3, k4 = jax.random.split(k, 4)
        gamma = jax.random.uniform(k1, (c,), minval=0.5, maxval=1.5)
        beta = 0.1 * jax.random.normal(k2, (c,))
        mean = 0.1 * jax.random.normal(k3, (c,))
        var = jax.random.uniform(k4, (c,), minval=0.5, maxval=1.5)
        return gamma, beta, mean, var

    wconv_pt = 0.3 * jax.random.normal(ks[0], (out_channels, in_channels))          # Conv2d 1x1
    w1_pt = 0.3 * jax.random.normal(ks[1], (inter_channels, in_channels))           # Conv2d 1x1
    wt_pt = 0.3 * jax.random.normal(ks[2], (inter_channels, inter_channels, 2, 2))  # ConvTranspose2d
    w3_pt = 0.3 * jax.random.normal(ks[3], (out_channels, inter_channels))          # Conv2d 1x1

    return dict(
        wconv_pt=wconv_pt, w1_pt=w1_pt, wt_pt=wt_pt, w3_pt=w3_pt,
        bn0=bn_params(ks[4], out_channels),
        bn1=bn_params(ks[5], inter_channels),
        bn2=bn_params(ks[6], inter_channels),
        bn3=bn_params(ks[7], out_channels),
        prelu=jnp.array([0.25, 0.20, 0.15], dtype=jnp.float32),
    )


def reference(x, max_indices, raw):
    """Pure-JAX NCHW reference (eval mode, full f32)."""
    def bn(y, p):
        g, b, m, v = p
        return (g[None, :, None, None] * (y - m[None, :, None, None])
                / jnp.sqrt(v[None, :, None, None] + _EPS) + b[None, :, None, None])

    def prelu(y, a):
        return jnp.where(y >= 0, y, a * y)

    N, _, H, W = x.shape
    # main branch
    up = jnp.einsum('nchw,oc->nohw', x, raw['wconv_pt'])
    up = bn(up, raw['bn0'])
    Co = up.shape[1]
    # MaxUnpool2d(2): scatter into (2H)*(2W) plane
    flat = jnp.zeros((N, Co, 4 * H * W), jnp.float32)
    vals = up.reshape(N, Co, H * W)
    ind = max_indices.reshape(N, Co, H * W)
    flat = flat.at[jnp.arange(N)[:, None, None],
                   jnp.arange(Co)[None, :, None], ind].set(vals)
    up_full = flat.reshape(N, Co, 2 * H, 2 * W)
    # ext branch
    t = prelu(bn(jnp.einsum('nchw,oc->nohw', x, raw['w1_pt']), raw['bn1']), raw['prelu'][0])
    e = jnp.einsum('nchw,codk->nohdwk', t, raw['wt_pt'])
    e = e.reshape(N, e.shape[1], 2 * H, 2 * W)
    e = prelu(bn(e, raw['bn2']), raw['prelu'][1])
    e = bn(jnp.einsum('nchw,oc->nohw', e, raw['w3_pt']), raw['bn3'])
    return prelu(up_full + e, raw['prelu'][2])


if __name__ == "__main__":
    N, Cin, Cinter, Cout, H, W = 2, 8, 4, 8, 16, 16

    key = jax.random.PRNGKey(0)
    kx, ki, kp = jax.random.split(key, 3)

    x = jax.random.normal(kx, (N, Cin, H, W), dtype=jnp.float32)

    # Synthetic MaxPool2d(2) indices: for each (n, c, i, j) pick one position in its 2x2
    # block of the (2H, 2W) plane, flattened per-channel (PyTorch convention).
    rnd = jax.random.randint(ki, (N, Cout, H, W), 0, 4)
    ii = jnp.arange(H)[None, None, :, None]
    jj = jnp.arange(W)[None, None, None, :]
    max_indices = ((2 * ii + rnd // 2) * (2 * W) + (2 * jj + rnd % 2)).astype(jnp.int32)

    raw = make_raw_params(kp, Cin, Cinter, Cout)
    packed = pack_params(raw)

    out = upsampling_bottleneck(x, max_indices, packed)
    out = jax.block_until_ready(out)

    ref = jax.block_until_ready(reference(x, max_indices, raw))

    assert out.shape == (N, Cout, 2 * H, 2 * W), out.shape
    # bf16 transport of activations/weights/output (inference precision choice) -> loose tolerance.
    assert jnp.allclose(out, ref, atol=1e-1, rtol=5e-2), float(jnp.max(jnp.abs(out - ref)))
    print("KERNEL_OK")
</pallas_src>

<mosaic_0001>
module attributes {stable_mosaic.version = 11 : i64} {
  func.func @upsampling_bottleneck_kernel(%arg0: i32, %arg1: i32, %arg2: memref<1x256x8xbf16, #tpu.memory_space<vmem>>, %arg3: memref<1x256x32xi8, #tpu.memory_space<vmem>>, %arg4: memref<1x128xi32, #tpu.memory_space<vmem>>, %arg5: memref<8x36xbf16, #tpu.memory_space<vmem>>, %arg6: memref<1x36xf32, #tpu.memory_space<vmem>>, %arg7: memref<4x16xbf16, #tpu.memory_space<vmem>>, %arg8: memref<1x16xf32, #tpu.memory_space<vmem>>, %arg9: memref<16x128xbf16, #tpu.memory_space<vmem>>, %arg10: memref<1x128xf32, #tpu.memory_space<vmem>>, %arg11: memref<3xf32, #tpu.memory_space<smem>>, %arg12: memref<1x256x128xbf16, #tpu.memory_space<vmem>>) attributes {dimension_semantics = [#tpu.dimension_semantics<parallel>, #tpu.dimension_semantics<parallel>], iteration_bounds = array<i64: 2, 1>, scalar_prefetch = 0 : i64, scratch_operands = 0 : i64, tpu.core_type = #tpu.core_type<tc>, window_params = [{transform_indices = @transform_0, window_bounds = array<i64: 1, 256, 8>}, {transform_indices = @transform_1, window_bounds = array<i64: 1, 256, 32>}, {pipeline_mode = #tpu.pipeline_mode<synchronous>, transform_indices = @transform_2, window_bounds = array<i64: 1, 128>}, {pipeline_mode = #tpu.pipeline_mode<synchronous>, transform_indices = @transform_3, window_bounds = array<i64: 8, 36>}, {pipeline_mode = #tpu.pipeline_mode<synchronous>, transform_indices = @transform_4, window_bounds = array<i64: 1, 36>}, {pipeline_mode = #tpu.pipeline_mode<synchronous>, transform_indices = @transform_5, window_bounds = array<i64: 4, 16>}, {pipeline_mode = #tpu.pipeline_mode<synchronous>, transform_indices = @transform_6, window_bounds = array<i64: 1, 16>}, {pipeline_mode = #tpu.pipeline_mode<synchronous>, transform_indices = @transform_7, window_bounds = array<i64: 16, 128>}, {pipeline_mode = #tpu.pipeline_mode<synchronous>, transform_indices = @transform_8, window_bounds = array<i64: 1, 128>}, {transform_indices = @transform_9, window_bounds = array<i64: 3>}, {transform_indices = @transform_10, window_bounds = array<i64: 1, 256, 128>}]} {
    %c0 = arith.constant 0 : index
    %0 = memref.load %arg11[%c0] : memref<3xf32, #tpu.memory_space<smem>>
    %c1 = arith.constant 1 : index
    %1 = memref.load %arg11[%c1] : memref<3xf32, #tpu.memory_space<smem>>
    %c2 = arith.constant 2 : index
    %2 = memref.load %arg11[%c2] : memref<3xf32, #tpu.memory_space<smem>>
    %c0_0 = arith.constant 0 : index
    %c0_1 = arith.constant 0 : index
    %c0_2 = arith.constant 0 : index
    %3 = vector.load %arg2[%c0_0, %c0_1, %c0_2] : memref<1x256x8xbf16, #tpu.memory_space<vmem>>, vector<1x256x8xbf16>
    %4 = vector.shape_cast %3 : vector<1x256x8xbf16> to vector<256x8xbf16>
    %c0_3 = arith.constant 0 : index
    %c0_4 = arith.constant 0 : index
    %5 = vector.load %arg5[%c0_3, %c0_4] : memref<8x36xbf16, #tpu.memory_space<vmem>>, vector<8x36xbf16>
    %cst = arith.constant dense<0.000000e+00> : vector<256x36xf32>
    %6 = tpu.matmul %4, %5, %cst {dimension_numbers = #tpu.dot_dimension_numbers<[1], [0], [0], [1], [0, 0, 1, 1], [], []>} : vector<256x8xbf16>, vector<8x36xbf16>, vector<256x36xf32> -> vector<256x36xf32>
    %c0_5 = arith.constant 0 : index
    %c0_6 = arith.constant 0 : index
    %7 = vector.load %arg6[%c0_5, %c0_6] : memref<1x36xf32, #tpu.memory_space<vmem>>, vector<1x36xf32>
    %8 = vector.broadcast %7 : vector<1x36xf32> to vector<256x36xf32>
    %9 = arith.addf %6, %8 : vector<256x36xf32>
    %10 = vector.extract_strided_slice %9 {offsets = [0, 0], sizes = [256, 4], strides = [1, 1]} : vector<256x36xf32> to vector<256x4xf32>
    %cst_7 = arith.constant 0.000000e+00 : f32
    %11 = vector.broadcast %cst_7 : f32 to vector<256x4xf32>
    %12 = arith.cmpf oge, %10, %11 : vector<256x4xf32>
    %13 = vector.broadcast %0 : f32 to vector<256x4xf32>
    %14 = arith.mulf %13, %10 : vector<256x4xf32>
    %15 = arith.select %12, %10, %14 : vector<256x4xi1>, vector<256x4xf32>
    %16 = vector.extract_strided_slice %9 {offsets = [0, 4], sizes = [256, 32], strides = [1, 1]} : vector<256x36xf32> to vector<256x32xf32>
    %17 = arith.truncf %15 : vector<256x4xf32> to vector<256x4xbf16>
    %c0_8 = arith.constant 0 : index
    %c0_9 = arith.constant 0 : index
    %18 = vector.load %arg7[%c0_8, %c0_9] : memref<4x16xbf16, #tpu.memory_space<vmem>>, vector<4x16xbf16>
    %cst_10 = arith.constant dense<0.000000e+00> : vector<256x16xf32>
    %19 = tpu.matmul %17, %18, %cst_10 {dimension_numbers = #tpu.dot_dimension_numbers<[1], [0], [0], [1], [0, 0, 1, 1], [], []>} : vector<256x4xbf16>, vector<4x16xbf16>, vector<256x16xf32> -> vector<256x16xf32>
    %c0_11 = arith.constant 0 : index
    %c0_12 = arith.constant 0 : index
    %20 = vector.load %arg8[%c0_11, %c0_12] : memref<1x16xf32, #tpu.memory_space<vmem>>, vector<1x16xf32>
    %21 = vector.broadcast %20 : vector<1x16xf32> to vector<256x16xf32>
    %22 = arith.addf %19, %21 : vector<256x16xf32>
    %cst_13 = arith.constant 0.000000e+00 : f32
    %23 = vector.broadcast %cst_13 : f32 to vector<256x16xf32>
    %24 = arith.cmpf oge, %22, %23 : vector<256x16xf32>
    %25 = vector.broadcast %1 : f32 to vector<256x16xf32>
    %26 = arith.mulf %25, %22 : vector<256x16xf32>
    %27 = arith.select %24, %22, %26 : vector<256x16xi1>, vector<256x16xf32>
    %28 = arith.truncf %27 : vector<256x16xf32> to vector<256x16xbf16>
    %c0_14 = arith.constant 0 : index
    %c0_15 = arith.constant 0 : index
    %29 = vector.load %arg9[%c0_14, %c0_15] : memref<16x128xbf16, #tpu.memory_space<vmem>>, vector<16x128xbf16>
    %cst_16 = arith.constant dense<0.000000e+00> : vector<256x128xf32>
    %30 = tpu.matmul %28, %29, %cst_16 {dimension_numbers = #tpu.dot_dimension_numbers<[1], [0], [0], [1], [0, 0, 1, 1], [], []>} : vector<256x16xbf16>, vector<16x128xbf16>, vector<256x128xf32> -> vector<256x128xf32>
    %c0_17 = arith.constant 0 : index
    %c0_18 = arith.constant 0 : index
    %31 = vector.load %arg10[%c0_17, %c0_18] : memref<1x128xf32, #tpu.memory_space<vmem>>, vector<1x128xf32>
    %32 = vector.broadcast %31 : vector<1x128xf32> to vector<256x128xf32>
    %33 = arith.addf %30, %32 : vector<256x128xf32>
    %34 = tpu.concatenate %16, %16, %16, %16 in 1 : vector<256x32xf32>, vector<256x32xf32>, vector<256x32xf32>, vector<256x32xf32> -> vector<256x128xf32>
    %c0_19 = arith.constant 0 : index
    %c0_20 = arith.constant 0 : index
    %c0_21 = arith.constant 0 : index
    %35 = vector.load %arg3[%c0_19, %c0_20, %c0_21] : memref<1x256x32xi8, #tpu.memory_space<vmem>>, vector<1x256x32xi8>
    %36 = vector.shape_cast %35 : vector<1x256x32xi8> to vector<256x32xi8>
    %37 = arith.extsi %36 : vector<256x32xi8> to vector<256x32xi32>
    %38 = tpu.concatenate %37, %37, %37, %37 in 1 : vector<256x32xi32>, vector<256x32xi32>, vector<256x32xi32>, vector<256x32xi32> -> vector<256x128xi32>
    %c0_22 = arith.constant 0 : index
    %c0_23 = arith.constant 0 : index
    %39 = vector.load %arg4[%c0_22, %c0_23] : memref<1x128xi32, #tpu.memory_space<vmem>>, vector<1x128xi32>
    %40 = vector.broadcast %39 : vector<1x128xi32> to vector<256x128xi32>
    %41 = arith.cmpi eq, %38, %40 : vector<256x128xi32>
    %cst_24 = arith.constant 0.000000e+00 : f32
    %42 = vector.broadcast %cst_24 : f32 to vector<256x128xf32>
    %43 = arith.select %41, %34, %42 : vector<256x128xi1>, vector<256x128xf32>
    %44 = arith.addf %43, %33 : vector<256x128xf32>
    %cst_25 = arith.constant 0.000000e+00 : f32
    %45 = vector.broadcast %cst_25 : f32 to vector<256x128xf32>
    %46 = arith.cmpf oge, %44, %45 : vector<256x128xf32>
    %47 = vector.broadcast %2 : f32 to vector<256x128xf32>
    %48 = arith.mulf %47, %44 : vector<256x128xf32>
    %49 = arith.select %46, %44, %48 : vector<256x128xi1>, vector<256x128xf32>
    %50 = arith.truncf %49 : vector<256x128xf32> to vector<256x128xbf16>
    %c0_26 = arith.constant 0 : index
    %c0_27 = arith.constant 0 : index
    %c0_28 = arith.constant 0 : index
    %51 = vector.load %arg12[%c0_26, %c0_27, %c0_28] : memref<1x256x128xbf16, #tpu.memory_space<vmem>>, vector<1x256x128xbf16>
    %52 = vector.shape_cast %51 : vector<1x256x128xbf16> to vector<256x128xbf16>
    %53 = vector.shape_cast %50 : vector<256x128xbf16> to vector<1x256x128xbf16>
    tpu.vector_store %arg12[%c0_26, %c0_27, %c0_28], %53 {strides = array<i32>} : memref<1x256x128xbf16, #tpu.memory_space<vmem>>, vector<1x256x128xbf16>,
    return
  }
  func.func @transform_0(%arg0: i32, %arg1: i32) -> (i32, i32, i32) {
    %c0_i32 = arith.constant 0 : i32
    %c0_i32_0 = arith.constant 0 : i32
    return %arg0, %arg1, %c0_i32 : i32, i32, i32
  }
  func.func @transform_1(%arg0: i32, %arg1: i32) -> (i32, i32, i32) {
    %c0_i32 = arith.constant 0 : i32
    %c0_i32_0 = arith.constant 0 : i32
    return %arg0, %arg1, %c0_i32 : i32, i32, i32
  }
  func.func @transform_2(%arg0: i32, %arg1: i32) -> (i32, i32) {
    %c0_i32 = arith.constant 0 : i32
    %c0_i32_0 = arith.constant 0 : i32
    %c0_i32_1 = arith.constant 0 : i32
    return %c0_i32, %c0_i32_0 : i32, i32
  }
  func.func @transform_3(%arg0: i32, %arg1: i32) -> (i32, i32) {
    %c0_i32 = arith.constant 0 : i32
    %c0_i32_0 = arith.constant 0 : i32
    %c0_i32_1 = arith.constant 0 : i32
    return %c0_i32, %c0_i32_0 : i32, i32
  }
  func.func @transform_4(%arg0: i32, %arg1: i32) -> (i32, i32) {
    %c0_i32 = arith.constant 0 : i32
    %c0_i32_0 = arith.constant 0 : i32
    %c0_i32_1 = arith.constant 0 : i32
    return %c0_i32, %c0_i32_0 : i32, i32
  }
  func.func @transform_5(%arg0: i32, %arg1: i32) -> (i32, i32) {
    %c0_i32 = arith.constant 0 : i32
    %c0_i32_0 = arith.constant 0 : i32
    %c0_i32_1 = arith.constant 0 : i32
    return %c0_i32, %c0_i32_0 : i32, i32
  }
  func.func @transform_6(%arg0: i32, %arg1: i32) -> (i32, i32) {
    %c0_i32 = arith.constant 0 : i32
    %c0_i32_0 = arith.constant 0 : i32
    %c0_i32_1 = arith.constant 0 : i32
    return %c0_i32, %c0_i32_0 : i32, i32
  }
  func.func @transform_7(%arg0: i32, %arg1: i32) -> (i32, i32) {
    %c0_i32 = arith.constant 0 : i32
    %c0_i32_0 = arith.constant 0 : i32
    %c0_i32_1 = arith.constant 0 : i32
    return %c0_i32, %c0_i32_0 : i32, i32
  }
  func.func @transform_8(%arg0: i32, %arg1: i32) -> (i32, i32) {
    %c0_i32 = arith.constant 0 : i32
    %c0_i32_0 = arith.constant 0 : i32
    %c0_i32_1 = arith.constant 0 : i32
    return %c0_i32, %c0_i32_0 : i32, i32
  }
  func.func @transform_9(%arg0: i32, %arg1: i32) -> i32 {
    %c0_i32 = arith.constant 0 : i32
    %c0_i32_0 = arith.constant 0 : i32
    return %c0_i32 : i32
  }
  func.func @transform_10(%arg0: i32, %arg1: i32) -> (i32, i32, i32) {
    %c0_i32 = arith.constant 0 : i32
    %c0_i32_0 = arith.constant 0 : i32
    return %arg0, %arg1, %c0_i32 : i32, i32, i32
  }
}

</mosaic_0001>

<llo_original>
// kernel: tpu_custom_call.1
$region0: #{tpu_custom_call.1}
  #allocation0 [shape = 'u32[]', space=smem, size = 0x4, offset = 0x4, fixed_abs, tag = 'smem constant byte address 0x4 - core index']
  #allocation1 [shape = 'u32[144,128]{1,0:T(1,128)}', space=vmem, size = 0x12000, scoped, tag = 'internal scratch']
  %s0 = inlined_call_operand.vmem [shape: bf16[2,256,8], index: 0, kind: input, shape index: {}]
  %s1 = inlined_call_operand.vmem [shape: s8[2,256,32], index: 1, kind: input, shape index: {}]
  %s2 = inlined_call_operand.vmem [shape: s32[1,128], index: 2, kind: input, shape index: {}]
  %s3 = inlined_call_operand.vmem [shape: bf16[8,36], index: 3, kind: input, shape index: {}]
  %s4 = inlined_call_operand.vmem [shape: f32[1,36], index: 4, kind: input, shape index: {}]
  %s5 = inlined_call_operand.vmem [shape: bf16[4,16], index: 5, kind: input, shape index: {}]
  %s6 = inlined_call_operand.vmem [shape: f32[1,16], index: 6, kind: input, shape index: {}]
  %s7 = inlined_call_operand.vmem [shape: bf16[16,128], index: 7, kind: input, shape index: {}]
  %s8 = inlined_call_operand.vmem [shape: f32[1,128], index: 8, kind: input, shape index: {}]
  %s9 = inlined_call_operand.vmem [shape: f32[3], index: 9, kind: input, shape index: {}]
  %s10 = inlined_call_operand.hbm [shape: bf16[2,256,128], index: 10, kind: output, shape index: {}]
  %s11 = sld [smem:[#allocation0]]
  $region77: #{tpu_custom_call.1} parent=0
    _
  %s13 = ssub.s32 1, %s11
  %s14 = scalar_select 0, %s13, %s11
  $region1: #{tpu_custom_call.1} parent=0
    #allocation2 [shape = 'u8[512]{0}', space=smem, size = 0x200, scoped, tag = 'input window, operand 9, single buffered']
    #allocation3 [shape = 's32[2]{0}', space=sflag, size = 0x8, scoped, tag = 'scoped memory for tpu_custom_call.1']
    #allocation4 [shape = 's32[2]{0}', space=sflag, size = 0x8, scoped, tag = 'scoped memory for tpu_custom_call.1']
    #allocation5 [shape = 'u8[131072]{0}', space=vmem, size = 0x20000, scoped, tag = 'output window, operand 0']
    %15 = vsyncpa [#allocation4], 0
    %16 = vsyncpa [#allocation3], 0
    %s17 = scalar_lea.sflag [#allocation3], 1
    %18 = vsyncpa %s17, 0
    loop: start=0, step=1, limit=4
    $region2: #{tpu_custom_call.1} parent=1 // loop_pre_header
      _
    $region3: #{tpu_custom_call.1} parent=1 // loop_header
      %s20 = sphi 0, %s24
      %p21 = scmp.ge.s32.totalorder %s20, 4
      %s27 = sphi 0, %s39
      %s28 = sphi 0, %s35
      %s29 = sphi 0, %s27
      %s30 = sphi 0, %s28
      %s31 = sphi 0, %s29
      %s32 = sphi 0, %s30
      %s44 = sphi 0, %s46
      %s47 = sphi 0, %s44
      %s48 = sphi 0, %s47
      %s64 = sphi 0, %s48
      %s72 = sphi 0, %s74
      %s75 = sphi 0, %s72
      %s76 = sphi 0, %s75
      %s92 = sphi 0, %s76
      %s96 = sphi 0, %s96
      %s98 = sphi 0, %s96
      %s99 = sphi 0, %s98
      %s113 = sphi 0, %s99
      %s117 = sphi 0, %s117
      %s119 = sphi 0, %s117
      %s120 = sphi 0, %s119
      %s134 = sphi 0, %s120
      %s138 = sphi 0, %s138
      %s140 = sphi 0, %s138
      %s141 = sphi 0, %s140
      %s155 = sphi 0, %s141
      %s159 = sphi 0, %s159
      %s161 = sphi 0, %s159
      %s162 = sphi 0, %s161
      %s176 = sphi 0, %s162
      %s180 = sphi 0, %s180
      %s182 = sphi 0, %s180
      %s183 = sphi 0, %s182
      %s197 = sphi 0, %s183
      %s201 = sphi 0, %s201
      %s203 = sphi 0, %s201
      %s204 = sphi 0, %s203
      %s218 = sphi 0, %s204
      %s222 = sphi 0, %s222
      %s224 = sphi 0, %s222
      %s225 = sphi 0, %s224
      %s239 = sphi 0, %s225
      %s243 = sphi 0, %s243
      %s245 = sphi 0, %s243
      %s246 = sphi 0, %s245
      %s260 = sphi 0, %s246
      %s268 = sphi 0, %s270
      %s271 = sphi 0, %s268
      %s272 = sphi 0, %s271
      %s288 = sphi 0, %s272
    $region4: #{tpu_custom_call.1} parent=1 // loop_header_branch
      %23 = sbr.rel (%p21) target = $region8
    $region5: #{tpu_custom_call.1} parent=1 // loop_body
      %s25 = ssub.s32 %s20, 1
      %s26 = ssub.s32 %s20, 2
      %s33 = sadd.s32 1, %s28
      %p34 = scmp.ge.s32.totalorder %s33, 1
      %s35 = scalar_select %p34, 0, %s33
      %s36 = sadd.s32 1, %s27
      %s37 = scalar_select %p34, %s36, %s27
      %p38 = scmp.ge.s32.totalorder %s37, 2
      %s39 = scalar_select %p38, 0, %s37
      %s40 = ssub.s32 %s27, %s39
      %s41 = ssub.s32 %s28, %s35
      %s42 = sor.u32 %s40, %s41
      %p43 = scmp.eq.s32.totalorder %s42, 0
      %s45 = sadd.s32 %s44, 1
      %s46 = scalar_select %p43, %s44, %s45
      %p49 = pneg %p43
      %p50 = scmp.eq.s32.totalorder %s20, 1
      %p51 = por %p49, %p50
      %p52 = scmp.ne.s32.totalorder %s44, %s47
      %p53 = scmp.eq.s32.totalorder %s20, 0
      %p54 = por %p52, %p53
      %p55 = scmp.ne.s32.totalorder %s44, %s47
      %p56 = scmp.eq.s32.totalorder %s25, 1
      %p57 = por %p55, %p56
      %p58 = scmp.ne.s32.totalorder %s47, %s48
      %p59 = scmp.eq.s32.totalorder %s25, 0
      %p60 = por %p58, %p59
      %p61 = scmp.ne.s32.totalorder %s47, %s48
      %p62 = scmp.eq.s32.totalorder %s26, 1
      %p63 = por %p61, %p62
      %p65 = scmp.ne.s32.totalorder %s48, %s64
      %p66 = scmp.eq.s32.totalorder %s26, 0
      %p67 = por %p65, %p66
      %s68 = ssub.s32 %s27, %s39
      %s69 = ssub.s32 %s28, %s35
      %s70 = sor.u32 %s68, %s69
      %p71 = scmp.eq.s32.totalorder %s70, 0
      %s73 = sadd.s32 %s72, 1
      %s74 = scalar_select %p71, %s72, %s73
      %p77 = pneg %p71
      %p78 = scmp.eq.s32.totalorder %s20, 1
      %p79 = por %p77, %p78
      %p80 = scmp.ne.s32.totalorder %s72, %s75
      %p81 = scmp.eq.s32.totalorder %s20, 0
      %p82 = por %p80, %p81
      %p83 = scmp.ne.s32.totalorder %s72, %s75
      %p84 = scmp.eq.s32.totalorder %s25, 1
      %p85 = por %p83, %p84
      %p86 = scmp.ne.s32.totalorder %s75, %s76
      %p87 = scmp.eq.s32.totalorder %s25, 0
      %p88 = por %p86, %p87
      %p89 = scmp.ne.s32.totalorder %s75, %s76
      %p90 = scmp.eq.s32.totalorder %s26, 1
      %p91 = por %p89, %p90
      %p93 = scmp.ne.s32.totalorder %s76, %s92
      %p94 = scmp.eq.s32.totalorder %s26, 0
      %p95 = por %p93, %p94
      %s97 = sadd.s32 %s96, 1
      %p100 = scmp.eq.s32.totalorder %s20, 1
      %p101 = scmp.ne.s32.totalorder %s96, %s98
      %p102 = scmp.eq.s32.totalorder %s20, 0
      %p103 = por %p101, %p102
      %p104 = scmp.ne.s32.totalorder %s96, %s98
      %p105 = scmp.eq.s32.totalorder %s25, 1
      %p106 = por %p104, %p105
      %p107 = scmp.ne.s32.totalorder %s98, %s99
      %p108 = scmp.eq.s32.totalorder %s25, 0
      %p109 = por %p107, %p108
      %p110 = scmp.ne.s32.totalorder %s98, %s99
      %p111 = scmp.eq.s32.totalorder %s26, 1
      %p112 = por %p110, %p111
      %p114 = scmp.ne.s32.totalorder %s99, %s113
      %p115 = scmp.eq.s32.totalorder %s26, 0
      %p116 = por %p114, %p115
      %s118 = sadd.s32 %s117, 1
      %p121 = scmp.eq.s32.totalorder %s20, 1
      %p122 = scmp.ne.s32.totalorder %s117, %s119
      %p123 = scmp.eq.s32.totalorder %s20, 0
      %p124 = por %p122, %p123
      %p125 = scmp.ne.s32.totalorder %s117, %s119
      %p126 = scmp.eq.s32.totalorder %s25, 1
      %p127 = por %p125, %p126
      %p128 = scmp.ne.s32.totalorder %s119, %s120
      %p129 = scmp.eq.s32.totalorder %s25, 0
      %p130 = por %p128, %p129
      %p131 = scmp.ne.s32.totalorder %s119, %s120
      %p132 = scmp.eq.s32.totalorder %s26, 1
      %p133 = por %p131, %p132
      %p135 = scmp.ne.s32.totalorder %s120, %s134
      %p136 = scmp.eq.s32.totalorder %s26, 0
      %p137 = por %p135, %p136
      %s139 = sadd.s32 %s138, 1
      %p142 = scmp.eq.s32.totalorder %s20, 1
      %p143 = scmp.ne.s32.totalorder %s138, %s140
      %p144 = scmp.eq.s32.totalorder %s20, 0
      %p145 = por %p143, %p144
      %p146 = scmp.ne.s32.totalorder %s138, %s140
      %p147 = scmp.eq.s32.totalorder %s25, 1
      %p148 = por %p146, %p147
      %p149 = scmp.ne.s32.totalorder %s140, %s141
      %p150 = scmp.eq.s32.totalorder %s25, 0
      %p151 = por %p149, %p150
      %p152 = scmp.ne.s32.totalorder %s140, %s141
      %p153 = scmp.eq.s32.totalorder %s26, 1
      %p154 = por %p152, %p153
      %p156 = scmp.ne.s32.totalorder %s141, %s155
      %p157 = scmp.eq.s32.totalorder %s26, 0
      %p158 = por %p156, %p157
      %s160 = sadd.s32 %s159, 1
      %p163 = scmp.eq.s32.totalorder %s20, 1
      %p164 = scmp.ne.s32.totalorder %s159, %s161
      %p165 = scmp.eq.s32.totalorder %s20, 0
      %p166 = por %p164, %p165
      %p167 = scmp.ne.s32.totalorder %s159, %s161
      %p168 = scmp.eq.s32.totalorder %s25, 1
      %p169 = por %p167, %p168
      %p170 = scmp.ne.s32.totalorder %s161, %s162
      %p171 = scmp.eq.s32.totalorder %s25, 0
      %p172 = por %p170, %p171
      %p173 = scmp.ne.s32.totalorder %s161, %s162
      %p174 = scmp.eq.s32.totalorder %s26, 1
      %p175 = por %p173, %p174
      %p177 = scmp.ne.s32.totalorder %s162, %s176
      %p178 = scmp.eq.s32.totalorder %s26, 0
      %p179 = por %p177, %p178
      %s181 = sadd.s32 %s180, 1
      %p184 = scmp.eq.s32.totalorder %s20, 1
      %p185 = scmp.ne.s32.totalorder %s180, %s182
      %p186 = scmp.eq.s32.totalorder %s20, 0
      %p187 = por %p185, %p186
      %p188 = scmp.ne.s32.totalorder %s180, %s182
      %p189 = scmp.eq.s32.totalorder %s25, 1
      %p190 = por %p188, %p189
      %p191 = scmp.ne.s32.totalorder %s182, %s183
      %p192 = scmp.eq.s32.totalorder %s25, 0
      %p193 = por %p191, %p192
      %p194 = scmp.ne.s32.totalorder %s182, %s183
      %p195 = scmp.eq.s32.totalorder %s26, 1
      %p196 = por %p194, %p195
      %p198 = scmp.ne.s32.totalorder %s183, %s197
      %p199 = scmp.eq.s32.totalorder %s26, 0
      %p200 = por %p198, %p199
      %s202 = sadd.s32 %s201, 1
      %p205 = scmp.eq.s32.totalorder %s20, 1
      %p206 = scmp.ne.s32.totalorder %s201, %s203
      %p207 = scmp.eq.s32.totalorder %s20, 0
      %p208 = por %p206, %p207
      %p209 = scmp.ne.s32.totalorder %s201, %s203
      %p210 = scmp.eq.s32.totalorder %s25, 1
      %p211 = por %p209, %p210
      %p212 = scmp.ne.s32.totalorder %s203, %s204
      %p213 = scmp.eq.s32.totalorder %s25, 0
      %p214 = por %p212, %p213
      %p215 = scmp.ne.s32.totalorder %s203, %s204
      %p216 = scmp.eq.s32.totalorder %s26, 1
      %p217 = por %p215, %p216
      %p219 = scmp.ne.s32.totalorder %s204, %s218
      %p220 = scmp.eq.s32.totalorder %s26, 0
      %p221 = por %p219, %p220
      %s223 = sadd.s32 %s222, 1
      %p226 = scmp.eq.s32.totalorder %s20, 1
      %p227 = scmp.ne.s32.totalorder %s222, %s224
      %p228 = scmp.eq.s32.totalorder %s20, 0
      %p229 = por %p227, %p228
      %p230 = scmp.ne.s32.totalorder %s222, %s224
      %p231 = scmp.eq.s32.totalorder %s25, 1
      %p232 = por %p230, %p231
      %p233 = scmp.ne.s32.totalorder %s224, %s225
      %p234 = scmp.eq.s32.totalorder %s25, 0
      %p235 = por %p233, %p234
      %p236 = scmp.ne.s32.totalorder %s224, %s225
      %p237 = scmp.eq.s32.totalorder %s26, 1
      %p238 = por %p236, %p237
      %p240 = scmp.ne.s32.totalorder %s225, %s239
      %p241 = scmp.eq.s32.totalorder %s26, 0
      %p242 = por %p240, %p241
      %s244 = sadd.s32 %s243, 1
      %p247 = scmp.eq.s32.totalorder %s20, 1
      %p248 = scmp.ne.s32.totalorder %s243, %s245
      %p249 = scmp.eq.s32.totalorder %s20, 0
      %p250 = por %p248, %p249
      %p251 = scmp.ne.s32.totalorder %s243, %s245
      %p252 = scmp.eq.s32.totalorder %s25, 1
      %p253 = por %p251, %p252
      %p254 = scmp.ne.s32.totalorder %s245, %s246
      %p255 = scmp.eq.s32.totalorder %s25, 0
      %p256 = por %p254, %p255
      %p257 = scmp.ne.s32.totalorder %s245, %s246
      %p258 = scmp.eq.s32.totalorder %s26, 1
      %p259 = por %p257, %p258
      %p261 = scmp.ne.s32.totalorder %s246, %s260
      %p262 = scmp.eq.s32.totalorder %s26, 0
      %p263 = por %p261, %p262
      %s264 = ssub.s32 %s27, %s39
      %s265 = ssub.s32 %s28, %s35
      %s266 = sor.u32 %s264, %s265
      %p267 = scmp.eq.s32.totalorder %s266, 0
      %s269 = sadd.s32 %s268, 1
      %s270 = scalar_select %p267, %s268, %s269
      %p273 = pneg %p267
      %p274 = scmp.eq.s32.totalorder %s20, 1
      %p275 = por %p273, %p274
      %p276 = scmp.ne.s32.totalorder %s268, %s271
      %p277 = scmp.eq.s32.totalorder %s20, 0
      %p278 = por %p276, %p277
      %p279 = scmp.ne.s32.totalorder %s268, %s271
      %p280 = scmp.eq.s32.totalorder %s25, 1
      %p281 = por %p279, %p280
      %p282 = scmp.ne.s32.totalorder %s271, %s272
      %p283 = scmp.eq.s32.totalorder %s25, 0
      %p284 = por %p282, %p283
      %p285 = scmp.ne.s32.totalorder %s271, %s272
      %p286 = scmp.eq.s32.totalorder %s26, 1
      %p287 = por %p285, %p286
      %p289 = scmp.ne.s32.totalorder %s272, %s288
      %p290 = scmp.eq.s32.totalorder %s26, 0
      %p291 = por %p289, %p290
      %p292 = scmp.le.s32.totalorder 1, %s20
      %p293 = scmp.lt.s32.totalorder %s20, 3
      %p294 = pnand %p292, %p293
      %p295 = pneg %p294
      // Predicated region
      $region9: #{tpu_custom_call.1} parent=5 // pred_check
        _
      $region10: #{tpu_custom_call.1} parent=5 // pred_check_branch
        %297 = sbr.rel (%p294) target = $region12
      $region11: #{tpu_custom_call.1} parent=5 // pred_region
        %s298 = ssub.s32 %s20, 1
        // Predicated region
        $region13: #{tpu_custom_call.1} parent=11 // pred_check
          %p299 = pneg %p109
        $region14: #{tpu_custom_call.1} parent=11 // pred_check_branch
          %301 = sbr.rel (%p299) target = $region16
        $region15: #{tpu_custom_call.1} parent=11 // pred_region
          _
        $region16: #{tpu_custom_call.1} parent=11 // pred_fallthru
          _
        // Predicated region
        $region17: #{tpu_custom_call.1} parent=11 // pred_check
          %p302 = pneg %p130
        $region18: #{tpu_custom_call.1} parent=11 // pred_check_branch
          %304 = sbr.rel (%p302) target = $region20
        $region19: #{tpu_custom_call.1} parent=11 // pred_region
          _
        $region20: #{tpu_custom_call.1} parent=11 // pred_fallthru
          _
        // Predicated region
        $region21: #{tpu_custom_call.1} parent=11 // pred_check
          %p305 = pneg %p151
        $region22: #{tpu_custom_call.1} parent=11 // pred_check_branch
          %307 = sbr.rel (%p305) target = $region24
        $region23: #{tpu_custom_call.1} parent=11 // pred_region
          _
        $region24: #{tpu_custom_call.1} parent=11 // pred_fallthru
          _
        // Predicated region
        $region25: #{tpu_custom_call.1} parent=11 // pred_check
          %p308 = pneg %p172
        $region26: #{tpu_custom_call.1} parent=11 // pred_check_branch
          %310 = sbr.rel (%p308) target = $region28
        $region27: #{tpu_custom_call.1} parent=11 // pred_region
          _
        $region28: #{tpu_custom_call.1} parent=11 // pred_fallthru
          _
        // Predicated region
        $region29: #{tpu_custom_call.1} parent=11 // pred_check
          %p311 = pneg %p193
        $region30: #{tpu_custom_call.1} parent=11 // pred_check_branch
          %313 = sbr.rel (%p311) target = $region32
        $region31: #{tpu_custom_call.1} parent=11 // pred_region
          _
        $region32: #{tpu_custom_call.1} parent=11 // pred_fallthru
          _
        // Predicated region
        $region33: #{tpu_custom_call.1} parent=11 // pred_check
          %p314 = pneg %p214
        $region34: #{tpu_custom_call.1} parent=11 // pred_check_branch
          %316 = sbr.rel (%p314) target = $region36
        $region35: #{tpu_custom_call.1} parent=11 // pred_region
          _
        $region36: #{tpu_custom_call.1} parent=11 // pred_fallthru
          _
        // Predicated region
        $region37: #{tpu_custom_call.1} parent=11 // pred_check
          %p317 = pneg %p235
        $region38: #{tpu_custom_call.1} parent=11 // pred_check_branch
          %319 = sbr.rel (%p317) target = $region40
        $region39: #{tpu_custom_call.1} parent=11 // pred_region
          _
        $region40: #{tpu_custom_call.1} parent=11 // pred_fallthru
          _
        // Predicated region
        $region41: #{tpu_custom_call.1} parent=11 // pred_check
          %p320 = pneg %p256
        $region42: #{tpu_custom_call.1} parent=11 // pred_check_branch
          %322 = sbr.rel (%p320) target = $region44
        $region43: #{tpu_custom_call.1} parent=11 // pred_region
          %s324 = ssub.s32 16, 16
          %325 = vsyncadd [#allocation4], %s324
          %s327 = sshll.u32 %s9, 4
          %s328 = int_to_ptr.vmem [resolvable:$true] %s327
          %330 = dma.vmem_to_smem %s328, 16, [#allocation2], [#allocation4]
        $region44: #{tpu_custom_call.1} parent=11 // pred_fallthru
          _
      $region12: #{tpu_custom_call.1} parent=5 // pred_fallthru
        _
      %p331 = scmp.lt.s32.totalorder %s20, 2
      // Predicated region
      $region45: #{tpu_custom_call.1} parent=5 // pred_check
        %p332 = pneg %p331
      $region46: #{tpu_custom_call.1} parent=5 // pred_check_branch
        %334 = sbr.rel (%p332) target = $region48
      $region47: #{tpu_custom_call.1} parent=5 // pred_region
        // Predicated region
        $region49: #{tpu_custom_call.1} parent=47 // pred_check
          %p335 = pneg %p54
        $region50: #{tpu_custom_call.1} parent=47 // pred_check_branch
          %337 = sbr.rel (%p335) target = $region52
        $region51: #{tpu_custom_call.1} parent=47 // pred_region
          %s338 = smul.u32 32, %s28
          %p339 = scmp.lt.s32.totalorder %s27, 1
          %s340 = scalar_select %p339, %s27, 1
          %p341 = scmp.lt.s32.totalorder %s338, 31
          %s342 = scalar_select %p341, %s338, 31
          %s343 = smul.addr %s340, 32
          %s344 = sadd.s32 %s342, %s343
          %s345 = smul.addr %s344, 4
          %s346 = scalar_lea.vmem %s0, %s345
          %s347 = smul.u32 32, %s28
        $region52: #{tpu_custom_call.1} parent=47 // pred_fallthru
          _
        // Predicated region
        $region53: #{tpu_custom_call.1} parent=47 // pred_check
          %p348 = pneg %p82
        $region54: #{tpu_custom_call.1} parent=47 // pred_check_branch
          %350 = sbr.rel (%p348) target = $region56
        $region55: #{tpu_custom_call.1} parent=47 // pred_region
          %s351 = smul.u32 8, %s28
          %p352 = scmp.lt.s32.totalorder %s27, 1
          %s353 = scalar_select %p352, %s27, 1
          %p354 = scmp.lt.s32.totalorder %s351, 7
          %s355 = scalar_select %p354, %s351, 7
          %s356 = smul.addr %s353, 8
          %s357 = sadd.s32 %s355, %s356
          %s358 = smul.addr %s357, 8
          %s359 = scalar_lea.vmem %s1, %s358
          %s360 = smul.u32 8, %s28
        $region56: #{tpu_custom_call.1} parent=47 // pred_fallthru
          _
      $region48: #{tpu_custom_call.1} parent=5 // pred_fallthru
        _
      %p361 = scmp.le.s32.totalorder 1, %s20
      %p362 = scmp.lt.s32.totalorder %s20, 3
      %p363 = pnand %p361, %p362
      %p364 = pneg %p363
      // Predicated region
      $region57: #{tpu_custom_call.1} parent=5 // pred_check
        _
      $region58: #{tpu_custom_call.1} parent=5 // pred_check_branch
        %366 = sbr.rel (%p363) target = $region60
      $region59: #{tpu_custom_call.1} parent=5 // pred_region
        %s367 = ssub.s32 %s20, 1
        // Predicated region
        $region61: #{tpu_custom_call.1} parent=59 // pred_check
          %p368 = pneg %p256
        $region62: #{tpu_custom_call.1} parent=59 // pred_check_branch
          %370 = sbr.rel (%p368) target = $region64
        $region63: #{tpu_custom_call.1} parent=59 // pred_region
          %371 = dma.done [#allocation4], 16
        $region64: #{tpu_custom_call.1} parent=59 // pred_fallthru
          _
        %372 = sfence
        %s373 = smul.u32 32, %s30
        %p374 = scmp.lt.s32.totalorder %s29, 1
        %s375 = scalar_select %p374, %s29, 1
        %p376 = scmp.lt.s32.totalorder %s373, 31
        %s377 = scalar_select %p376, %s373, 31
        %s378 = smul.addr %s375, 32
        %s379 = sadd.s32 %s377, %s378
        %s380 = smul.addr %s379, 4
        %s381 = scalar_lea.vmem %s0, %s380
        %p382 = pneg %p60
        %p383 = pneg %p57
        %s384 = smul.u32 8, %s30
        %p385 = scmp.lt.s32.totalorder %s29, 1
        %s386 = scalar_select %p385, %s29, 1
        %p387 = scmp.lt.s32.totalorder %s384, 7
        %s388 = scalar_select %p387, %s384, 7
        %s389 = smul.addr %s386, 8
        %s390 = sadd.s32 %s388, %s389
        %s391 = smul.addr %s390, 8
        %s392 = scalar_lea.vmem %s1, %s391
        %p393 = pneg %p88
        %p394 = pneg %p85
        %p395 = pneg %p109
        %p396 = pneg %p106
        %p397 = pneg %p130
        %p398 = pneg %p127
        %p399 = pneg %p151
        %p400 = pneg %p148
        %p401 = pneg %p172
        %p402 = pneg %p169
        %p403 = pneg %p193
        %p404 = pneg %p190
        %p405 = pneg %p214
        %p406 = pneg %p211
        %p407 = pneg %p235
        %p408 = pneg %p232
        %p409 = pneg %p256
        %p410 = pneg %p253
        %p411 = pneg %p284
        %p412 = pneg %p281
        %s413 = sand.u32 %s271, 1
        %s414 = scalar_lea.sflag [#allocation3], %s413
        %s415 = sand.u32 %s271, 1
        %s416 = smul.addr %s415, 128
        %s417 = scalar_lea.vmem [#allocation5], %s416
        %s418 = smul.u32 32, %s30
        %p419 = scmp.lt.s32.totalorder %s29, 1
        %s420 = scalar_select %p419, %s29, 1
        %p421 = scmp.lt.s32.totalorder %s418, 31
        %s422 = scalar_select %p421, %s418, 31
        %s423 = smul.addr %s420, 32
        %s424 = sadd.s32 %s422, %s423
        %s425 = smul.addr %s424, 4
        %s426 = scalar_lea.vmem %s0, %s425
        %s427 = smul.u32 32, %s30
        %s428 = smul.u32 8, %s30
        %p429 = scmp.lt.s32.totalorder %s29, 1
        %s430 = scalar_select %p429, %s29, 1
        %p431 = scmp.lt.s32.totalorder %s428, 7
        %s432 = scalar_select %p431, %s428, 7
        %s433 = smul.addr %s430, 8
        %s434 = sadd.s32 %s432, %s433
        %s435 = smul.addr %s434, 8
        %s436 = scalar_lea.vmem %s1, %s435
        %s437 = smul.u32 8, %s30
        %s438 = smul.u32 32, %s30
        %s440 = sld [smem:[#allocation2]]
        %s441 = sld [smem:[#allocation2 + $0x1]]
        %s442 = sld [smem:[#allocation2 + $0x2]]
        %v443 = vld [vmem:[%s426] sm:$0xf]
        %v444 = vld [vmem:[%s426 + $0x4] sm:$0xf]
        %v445 = vld [vmem:[%s426 + $0x8] sm:$0xf]
        %v446 = vld [vmem:[%s426 + $0xc] sm:$0xf]
        %v447 = vld [vmem:[%s426 + $0x10] sm:$0xf]
        %v448 = vld [vmem:[%s426 + $0x14] sm:$0xf]
        %v449 = vld [vmem:[%s426 + $0x18] sm:$0xf]
        %v450 = vld [vmem:[%s426 + $0x1c] sm:$0xf]
        %v451 = vld [vmem:[%s426 + $0x20] sm:$0xf]
        %v452 = vld [vmem:[%s426 + $0x24] sm:$0xf]
        %v453 = vld [vmem:[%s426 + $0x28] sm:$0xf]
        %v454 = vld [vmem:[%s426 + $0x2c] sm:$0xf]
        %v455 = vld [vmem:[%s426 + $0x30] sm:$0xf]
        %v456 = vld [vmem:[%s426 + $0x34] sm:$0xf]
        %v457 = vld [vmem:[%s426 + $0x38] sm:$0xf]
        %v458 = vld [vmem:[%s426 + $0x3c] sm:$0xf]
        %v459 = vld [vmem:[%s426 + $0x40] sm:$0xf]
        %v460 = vld [vmem:[%s426 + $0x44] sm:$0xf]
        %v461 = vld [vmem:[%s426 + $0x48] sm:$0xf]
        %v462 = vld [vmem:[%s426 + $0x4c] sm:$0xf]
        %v463 = vld [vmem:[%s426 + $0x50] sm:$0xf]
        %v464 = vld [vmem:[%s426 + $0x54] sm:$0xf]
        %v465 = vld [vmem:[%s426 + $0x58] sm:$0xf]
        %v466 = vld [vmem:[%s426 + $0x5c] sm:$0xf]
        %v467 = vld [vmem:[%s426 + $0x60] sm:$0xf]
        %v468 = vld [vmem:[%s426 + $0x64] sm:$0xf]
        %v469 = vld [vmem:[%s426 + $0x68] sm:$0xf]
        %v470 = vld [vmem:[%s426 + $0x6c] sm:$0xf]
        %v471 = vld [vmem:[%s426 + $0x70] sm:$0xf]
        %v472 = vld [vmem:[%s426 + $0x74] sm:$0xf]
        %v473 = vld [vmem:[%s426 + $0x78] sm:$0xf]
        %v474 = vld [vmem:[%s426 + $0x7c] sm:$0xf]
        %v475 = vld [vmem:[%s3] sm:$0xf]
        %v476 = vld [vmem:[%s4] sm:$0x1]
        %v478 = vlaneseq
        %v479 = vshrl.u32 %v478, 7
        %v480 = vsub.s32 0, %v479
        %v481 = vrot.slane %v476, %v480
        %v515 = vunpack.c.l.b16 %v443
        %v516 = vunpack.c.l.b16 %v444
        %v517 = vunpack.c.l.b16 %v445
        %v518 = vunpack.c.l.b16 %v446
        %v519 = vunpack.c.l.b16 %v447
        %v520 = vunpack.c.l.b16 %v448
        %v521 = vunpack.c.l.b16 %v449
        %v522 = vunpack.c.l.b16 %v450
        %v523 = vunpack.c.l.b16 %v451
        %v524 = vunpack.c.l.b16 %v452
        %v525 = vunpack.c.l.b16 %v453
        %v526 = vunpack.c.l.b16 %v454
        %v527 = vunpack.c.l.b16 %v455
        %v528 = vunpack.c.l.b16 %v456
        %v529 = vunpack.c.l.b16 %v457
        %v530 = vunpack.c.l.b16 %v458
        %v531 = vunpack.c.l.b16 %v459
        %v532 = vunpack.c.l.b16 %v460
        %v533 = vunpack.c.l.b16 %v461
        %v534 = vunpack.c.l.b16 %v462
        %v535 = vunpack.c.l.b16 %v463
        %v536 = vunpack.c.l.b16 %v464
        %v537 = vunpack.c.l.b16 %v465
        %v538 = vunpack.c.l.b16 %v466
        %v539 = vunpack.c.l.b16 %v467
        %v540 = vunpack.c.l.b16 %v468
        %v541 = vunpack.c.l.b16 %v469
        %v542 = vunpack.c.l.b16 %v470
        %v543 = vunpack.c.l.b16 %v471
        %v544 = vunpack.c.l.b16 %v472
        %v545 = vunpack.c.l.b16 %v473
        %v546 = vunpack.c.l.b16 %v474
        %v547 = vpack.c.b16 %v516, %v515
        %v548 = vpack.c.b16 %v518, %v517
        %v549 = vpack.c.b16 %v520, %v519
        %v550 = vpack.c.b16 %v522, %v521
        %v551 = vpack.c.b16 %v524, %v523
        %v552 = vpack.c.b16 %v526, %v525
        %v553 = vpack.c.b16 %v528, %v527
        %v554 = vpack.c.b16 %v530, %v529
        %v555 = vpack.c.b16 %v532, %v531
        %v556 = vpack.c.b16 %v534, %v533
        %v557 = vpack.c.b16 %v536, %v535
        %v558 = vpack.c.b16 %v538, %v537
        %v559 = vpack.c.b16 %v540, %v539
        %v560 = vpack.c.b16 %v542, %v541
        %v561 = vpack.c.b16 %v544, %v543
        %v562 = vpack.c.b16 %v546, %v545
        %vm563 = vcmask 64512
        %v565 = vsel %vm563, %v547, 0
        %v568 = vsel %vm563, %v548, 0
        %v571 = vsel %vm563, %v549, 0
        %v574 = vsel %vm563, %v550, 0
        %v577 = vsel %vm563, %v551, 0
        %v580 = vsel %vm563, %v552, 0
        %v583 = vsel %vm563, %v553, 0
        %v586 = vsel %vm563, %v554, 0
        %v589 = vsel %vm563, %v555, 0
        %v592 = vsel %vm563, %v556, 0
        %v595 = vsel %vm563, %v557, 0
        %v598 = vsel %vm563, %v558, 0
        %v601 = vsel %vm563, %v559, 0
        %v604 = vsel %vm563, %v560, 0
        %v607 = vsel %vm563, %v561, 0
        %v610 = vsel %vm563, %v562, 0
        %vm612 = vcmask 1043456
        %v614 = vsel %vm612, %v475, 0
        %616 = vmatprep.subr.bf16.mxu0 0
        %617 = vmatpush1.bf16.msra.mxu0 %v614
        %618 = vmatprep.subr.bf16.mxu0 0
        %619 = vmatpush1.bf16.msra.mxu0 0
        %620 = vmatprep.subr.bf16.mxu0 0
        %621 = vmatpush1.bf16.msra.mxu0 0
        %622 = vmatprep.subr.bf16.mxu0 0
        %623 = vmatpush1.bf16.msra.mxu0 0
        %624 = vmatprep.subr.bf16.mxu0 0
        %625 = vmatpush1.bf16.msra.mxu0 0
        %626 = vmatprep.subr.bf16.mxu0 0
        %627 = vmatpush1.bf16.msra.mxu0 0
        %628 = vmatprep.subr.bf16.mxu0 0
        %629 = vmatpush1.bf16.msra.mxu0 0
        %630 = vmatprep.subr.bf16.mxu0 0
        %631 = vmatpush1.bf16.msra.mxu0 0
        %632 = vmatprep.subr.bf16.mxu0 0
        %633 = vmatpush1.bf16.msra.mxu0 0
        %634 = vmatprep.subr.bf16.mxu0 0
        %635 = vmatpush1.bf16.msra.mxu0 0
        %636 = vmatprep.subr.bf16.mxu0 0
        %637 = vmatpush1.bf16.msra.mxu0 0
        %638 = vmatprep.subr.bf16.mxu0 0
        %639 = vmatpush1.bf16.msra.mxu0 0
        %640 = vmatprep.subr.bf16.mxu0 0
        %641 = vmatpush1.bf16.msra.mxu0 0
        %642 = vmatprep.subr.bf16.mxu0 0
        %643 = vmatpush1.bf16.msra.mxu0 0
        %644 = vmatprep.subr.bf16.mxu0 0
        %645 = vmatpush1.bf16.msra.mxu0 0
        %646 = vmatprep.subr.bf16.mxu0 0
        %647 = vmatpush1.bf16.msra.mxu0 0
        %648 = vmatprep.mubr.bf16.mxu0 0
        %649 = vmatmul.mubr.bf16.gmra.mrb[0].mxu0 %v565
        %v650 = vpop.f32.mrb[0].mxu0
        %v651 = vadd.f32 %v481, %v650
        %v652 = vpop.f32.mrb[0].mxu0
        %v653 = vpop.f32.mrb[0].mxu0
        %v654 = vadd.f32 %v481, %v653
        %v655 = vpop.f32.mrb[0].mxu0
        %656 = vmatprep.mubr.bf16.mxu0 0
        %657 = vmatmul.mubr.bf16.gmra.mrb[0].mxu0 %v568
        %v658 = vpop.f32.mrb[0].mxu0
        %v659 = vadd.f32 %v481, %v658
        %v660 = vpop.f32.mrb[0].mxu0
        %v661 = vpop.f32.mrb[0].mxu0
        %v662 = vadd.f32 %v481, %v661
        %v663 = vpop.f32.mrb[0].mxu0
        %664 = vmatprep.mubr.bf16.mxu0 0
        %665 = vmatmul.mubr.bf16.gmra.mrb[0].mxu0 %v571
        %v666 = vpop.f32.mrb[0].mxu0
        %v667 = vadd.f32 %v481, %v666
        %v668 = vpop.f32.mrb[0].mxu0
        %v669 = vpop.f32.mrb[0].mxu0
        %v670 = vadd.f32 %v481, %v669
        %v671 = vpop.f32.mrb[0].mxu0
        %672 = vmatprep.mubr.bf16.mxu0 0
        %673 = vmatmul.mubr.bf16.gmra.mrb[0].mxu0 %v574
        %v674 = vpop.f32.mrb[0].mxu0
        %v675 = vadd.f32 %v481, %v674
        %v676 = vpop.f32.mrb[0].mxu0
        %v677 = vpop.f32.mrb[0].mxu0
        %v678 = vadd.f32 %v481, %v677
        %v679 = vpop.f32.mrb[0].mxu0
        %680 = vmatprep.mubr.bf16.mxu0 0
        %681 = vmatmul.mubr.bf16.gmra.mrb[0].mxu0 %v577
        %v682 = vpop.f32.mrb[0].mxu0
        %v683 = vadd.f32 %v481, %v682
        %v684 = vpop.f32.mrb[0].mxu0
        %v685 = vpop.f32.mrb[0].mxu0
        %v686 = vadd.f32 %v481, %v685
        %v687 = vpop.f32.mrb[0].mxu0
        %688 = vmatprep.mubr.bf16.mxu0 0
        %689 = vmatmul.mubr.bf16.gmra.mrb[0].mxu0 %v580
        %v690 = vpop.f32.mrb[0].mxu0
        %v691 = vadd.f32 %v481, %v690
        %v692 = vpop.f32.mrb[0].mxu0
        %v693 = vpop.f32.mrb[0].mxu0
        %v694 = vadd.f32 %v481, %v693
        %v695 = vpop.f32.mrb[0].mxu0
        %696 = vmatprep.mubr.bf16.mxu0 0
        %697 = vmatmul.mubr.bf16.gmra.mrb[0].mxu0 %v583
        %v698 = vpop.f32.mrb[0].mxu0
        %v699 = vadd.f32 %v481, %v698
        %v700 = vpop.f32.mrb[0].mxu0
        %v701 = vpop.f32.mrb[0].mxu0
        %v702 = vadd.f32 %v481, %v701
        %v703 = vpop.f32.mrb[0].mxu0
        %704 = vmatprep.mubr.bf16.mxu0 0
        %705 = vmatmul.mubr.bf16.gmra.mrb[0].mxu0 %v586
        %v706 = vpop.f32.mrb[0].mxu0
        %v707 = vadd.f32 %v481, %v706
        %v708 = vpop.f32.mrb[0].mxu0
        %v709 = vpop.f32.mrb[0].mxu0
        %v710 = vadd.f32 %v481, %v709
        %v711 = vpop.f32.mrb[0].mxu0
        %712 = vmatprep.mubr.bf16.mxu0 0
        %713 = vmatmul.mubr.bf16.gmra.mrb[0].mxu0 %v589
        %v714 = vpop.f32.mrb[0].mxu0
        %v715 = vadd.f32 %v481, %v714
        %v716 = vpop.f32.mrb[0].mxu0
        %v717 = vpop.f32.mrb[0].mxu0
        %v718 = vadd.f32 %v481, %v717
        %v719 = vpop.f32.mrb[0].mxu0
        %720 = vmatprep.mubr.bf16.mxu0 0
        %721 = vmatmul.mubr.bf16.gmra.mrb[0].mxu0 %v592
        %v722 = vpop.f32.mrb[0].mxu0
        %v723 = vadd.f32 %v481, %v722
        %v724 = vpop.f32.mrb[0].mxu0
        %v725 = vpop.f32.mrb[0].mxu0
        %v726 = vadd.f32 %v481, %v725
        %v727 = vpop.f32.mrb[0].mxu0
        %728 = vmatprep.mubr.bf16.mxu0 0
        %729 = vmatmul.mubr.bf16.gmra.mrb[0].mxu0 %v595
        %v730 = vpop.f32.mrb[0].mxu0
        %v731 = vadd.f32 %v481, %v730
        %v732 = vpop.f32.mrb[0].mxu0
        %v733 = vpop.f32.mrb[0].mxu0
        %v734 = vadd.f32 %v481, %v733
        %v735 = vpop.f32.mrb[0].mxu0
        %736 = vmatprep.mubr.bf16.mxu0 0
        %737 = vmatmul.mubr.bf16.gmra.mrb[0].mxu0 %v598
        %v738 = vpop.f32.mrb[0].mxu0
        %v739 = vadd.f32 %v481, %v738
        %v740 = vpop.f32.mrb[0].mxu0
        %v741 = vpop.f32.mrb[0].mxu0
        %v742 = vadd.f32 %v481, %v741
        %v743 = vpop.f32.mrb[0].mxu0
        %744 = vmatprep.mubr.bf16.mxu0 0
        %745 = vmatmul.mubr.bf16.gmra.mrb[0].mxu0 %v601
        %v746 = vpop.f32.mrb[0].mxu0
        %v747 = vadd.f32 %v481, %v746
        %v748 = vpop.f32.mrb[0].mxu0
        %v749 = vpop.f32.mrb[0].mxu0
        %v750 = vadd.f32 %v481, %v749
        %v751 = vpop.f32.mrb[0].mxu0
        %752 = vmatprep.mubr.bf16.mxu0 0
        %753 = vmatmul.mubr.bf16.gmra.mrb[0].mxu0 %v604
        %v754 = vpop.f32.mrb[0].mxu0
        %v755 = vadd.f32 %v481, %v754
        %v756 = vpop.f32.mrb[0].mxu0
        %v757 = vpop.f32.mrb[0].mxu0
        %v758 = vadd.f32 %v481, %v757
        %v759 = vpop.f32.mrb[0].mxu0
        %760 = vmatprep.mubr.bf16.mxu0 0
        %761 = vmatmul.mubr.bf16.gmra.mrb[0].mxu0 %v607
        %v762 = vpop.f32.mrb[0].mxu0
        %v763 = vadd.f32 %v481, %v762
        %v764 = vpop.f32.mrb[0].mxu0
        %v765 = vpop.f32.mrb[0].mxu0
        %v766 = vadd.f32 %v481, %v765
        %v767 = vpop.f32.mrb[0].mxu0
        %768 = vmatprep.mubr.bf16.mxu0 0
        %769 = vmatmul.mubr.bf16.gmra.mrb[0].mxu0 %v610
        %v770 = vpop.f32.mrb[0].mxu0
        %v771 = vadd.f32 %v481, %v770
        %v772 = vpop.f32.mrb[0].mxu0
        %v773 = vpop.f32.mrb[0].mxu0
        %v774 = vadd.f32 %v481, %v773
        %v775 = vpop.f32.mrb[0].mxu0
        %776 = vdwg.mxu0
        %vm777 = vcmp.ge.f32.partialorder %v651, 0.0
        %vm778 = vcmp.ge.f32.partialorder %v654, 0.0
        %vm779 = vcmp.ge.f32.partialorder %v659, 0.0
        %vm780 = vcmp.ge.f32.partialorder %v662, 0.0
        %vm781 = vcmp.ge.f32.partialorder %v667, 0.0
        %vm782 = vcmp.ge.f32.partialorder %v670, 0.0
        %vm783 = vcmp.ge.f32.partialorder %v675, 0.0
        %vm784 = vcmp.ge.f32.partialorder %v678, 0.0
        %vm785 = vcmp.ge.f32.partialorder %v683, 0.0
        %vm786 = vcmp.ge.f32.partialorder %v686, 0.0
        %vm787 = vcmp.ge.f32.partialorder %v691, 0.0
        %vm788 = vcmp.ge.f32.partialorder %v694, 0.0
        %vm789 = vcmp.ge.f32.partialorder %v699, 0.0
        %vm790 = vcmp.ge.f32.partialorder %v702, 0.0
        %vm791 = vcmp.ge.f32.partialorder %v707, 0.0
        %vm792 = vcmp.ge.f32.partialorder %v710, 0.0
        %vm793 = vcmp.ge.f32.partialorder %v715, 0.0
        %vm794 = vcmp.ge.f32.partialorder %v718, 0.0
        %vm795 = vcmp.ge.f32.partialorder %v723, 0.0
        %vm796 = vcmp.ge.f32.partialorder %v726, 0.0
        %vm797 = vcmp.ge.f32.partialorder %v731, 0.0
        %vm798 = vcmp.ge.f32.partialorder %v734, 0.0
        %vm799 = vcmp.ge.f32.partialorder %v739, 0.0
        %vm800 = vcmp.ge.f32.partialorder %v742, 0.0
        %vm801 = vcmp.ge.f32.partialorder %v747, 0.0
        %vm802 = vcmp.ge.f32.partialorder %v750, 0.0
        %vm803 = vcmp.ge.f32.partialorder %v755, 0.0
        %vm804 = vcmp.ge.f32.partialorder %v758, 0.0
        %vm805 = vcmp.ge.f32.partialorder %v763, 0.0
        %vm806 = vcmp.ge.f32.partialorder %v766, 0.0
        %vm807 = vcmp.ge.f32.partialorder %v771, 0.0
        %vm808 = vcmp.ge.f32.partialorder %v774, 0.0
        %v809 = vstv %s440
        %v810 = vmul.f32 %v809, %v651
        %v811 = vmul.f32 %v809, %v654
        %v812 = vmul.f32 %v809, %v659
        %v813 = vmul.f32 %v809, %v662
        %v814 = vmul.f32 %v809, %v667
        %v815 = vmul.f32 %v809, %v670
        %v816 = vmul.f32 %v809, %v675
        %v817 = vmul.f32 %v809, %v678
        %v818 = vmul.f32 %v809, %v683
        %v819 = vmul.f32 %v809, %v686
        %v820 = vmul.f32 %v809, %v691
        %v821 = vmul.f32 %v809, %v694
        %v822 = vmul.f32 %v809, %v699
        %v823 = vmul.f32 %v809, %v702
        %v824 = vmul.f32 %v809, %v707
        %v825 = vmul.f32 %v809, %v710
        %v826 = vmul.f32 %v809, %v715
        %v827 = vmul.f32 %v809, %v718
        %v828 = vmul.f32 %v809, %v723
        %v829 = vmul.f32 %v809, %v726
        %v830 = vmul.f32 %v809, %v731
        %v831 = vmul.f32 %v809, %v734
        %v832 = vmul.f32 %v809, %v739
        %v833 = vmul.f32 %v809, %v742
        %v834 = vmul.f32 %v809, %v747
        %v835 = vmul.f32 %v809, %v750
        %v836 = vmul.f32 %v809, %v755
        %v837 = vmul.f32 %v809, %v758
        %v838 = vmul.f32 %v809, %v763
        %v839 = vmul.f32 %v809, %v766
        %v840 = vmul.f32 %v809, %v771
        %v841 = vmul.f32 %v809, %v774
        %v842 = vsel %vm777, %v651, %v810
        %v843 = vsel %vm778, %v654, %v811
        %v844 = vsel %vm779, %v659, %v812
        %v845 = vsel %vm780, %v662, %v813
        %v846 = vsel %vm781, %v667, %v814
        %v847 = vsel %vm782, %v670, %v815
        %v848 = vsel %vm783, %v675, %v816
        %v849 = vsel %vm784, %v678, %v817
        %v850 = vsel %vm785, %v683, %v818
        %v851 = vsel %vm786, %v686, %v819
        %v852 = vsel %vm787, %v691, %v820
        %v853 = vsel %vm788, %v694, %v821
        %v854 = vsel %vm789, %v699, %v822
        %v855 = vsel %vm790, %v702, %v823
        %v856 = vsel %vm791, %v707, %v824
        %v857 = vsel %vm792, %v710, %v825
        %v858 = vsel %vm793, %v715, %v826
        %v859 = vsel %vm794, %v718, %v827
        %v860 = vsel %vm795, %v723, %v828
        %v861 = vsel %vm796, %v726, %v829
        %v862 = vsel %vm797, %v731, %v830
        %v863 = vsel %vm798, %v734, %v831
        %v864 = vsel %vm799, %v739, %v832
        %v865 = vsel %vm800, %v742, %v833
        %v866 = vsel %vm801, %v747, %v834
        %v867 = vsel %vm802, %v750, %v835
        %v868 = vsel %vm803, %v755, %v836
        %v869 = vsel %vm804, %v758, %v837
        %v870 = vsel %vm805, %v763, %v838
        %v871 = vsel %vm806, %v766, %v839
        %v872 = vsel %vm807, %v771, %v840
        %v873 = vsel %vm808, %v774, %v841
        %v874 = vpack.c.bf16 %v843, %v842
        %v875 = vpack.c.bf16 %v845, %v844
        %v876 = vpack.c.bf16 %v847, %v846
        %v877 = vpack.c.bf16 %v849, %v848
        %v878 = vpack.c.bf16 %v851, %v850
        %v879 = vpack.c.bf16 %v853, %v852
        %v880 = vpack.c.bf16 %v855, %v854
        %v881 = vpack.c.bf16 %v857, %v856
        %v882 = vpack.c.bf16 %v859, %v858
        %v883 = vpack.c.bf16 %v861, %v860
        %v884 = vpack.c.bf16 %v863, %v862
        %v885 = vpack.c.bf16 %v865, %v864
        %v886 = vpack.c.bf16 %v867, %v866
        %v887 = vpack.c.bf16 %v869, %v868
        %v888 = vpack.c.bf16 %v871, %v870
        %v889 = vpack.c.bf16 %v873, %v872
        %v890 = vld [vmem:[%s5] sm:$0x3]
        %v891 = vld [vmem:[%s6] sm:$0x1]
        %v893 = vlaneseq
        %v894 = vshrl.u32 %v893, 7
        %v895 = vsub.s32 0, %v894
        %v896 = vrot.slane %v891, %v895
        %vm898 = vcmask 31744
        %v900 = vsel %vm898, %v874, 0
        %v903 = vsel %vm898, %v875, 0
        %v906 = vsel %vm898, %v876, 0
        %v909 = vsel %vm898, %v877, 0
        %v912 = vsel %vm898, %v878, 0
        %v915 = vsel %vm898, %v879, 0
        %v918 = vsel %vm898, %v880, 0
        %v921 = vsel %vm898, %v881, 0
        %v924 = vsel %vm898, %v882, 0
        %v927 = vsel %vm898, %v883, 0
        %v930 = vsel %vm898, %v884, 0
        %v933 = vsel %vm898, %v885, 0
        %v936 = vsel %vm898, %v886, 0
        %v939 = vsel %vm898, %v887, 0
        %v942 = vsel %vm898, %v888, 0
        %v945 = vsel %vm898, %v889, 0
        %vm947 = vcmask 1041408
        %v949 = vsel %vm947, %v890, 0
        %951 = vmatprep.subr.bf16.mxu0 0
        %952 = vmatpush1.bf16.msra.mxu0 %v949
        %953 = vmatprep.subr.bf16.mxu0 0
        %954 = vmatpush1.bf16.msra.mxu0 0
        %955 = vmatprep.subr.bf16.mxu0 0
        %956 = vmatpush1.bf16.msra.mxu0 0
        %957 = vmatprep.subr.bf16.mxu0 0
        %958 = vmatpush1.bf16.msra.mxu0 0
        %959 = vmatprep.subr.bf16.mxu0 0
        %960 = vmatpush1.bf16.msra.mxu0 0
        %961 = vmatprep.subr.bf16.mxu0 0
        %962 = vmatpush1.bf16.msra.mxu0 0
        %963 = vmatprep.subr.bf16.mxu0 0
        %964 = vmatpush1.bf16.msra.mxu0 0
        %965 = vmatprep.subr.bf16.mxu0 0
        %966 = vmatpush1.bf16.msra.mxu0 0
        %967 = vmatprep.subr.bf16.mxu0 0
        %968 = vmatpush1.bf16.msra.mxu0 0
        %969 = vmatprep.subr.bf16.mxu0 0
        %970 = vmatpush1.bf16.msra.mxu0 0
        %971 = vmatprep.subr.bf16.mxu0 0
        %972 = vmatpush1.bf16.msra.mxu0 0
        %973 = vmatprep.subr.bf16.mxu0 0
        %974 = vmatpush1.bf16.msra.mxu0 0
        %975 = vmatprep.subr.bf16.mxu0 0
        %976 = vmatpush1.bf16.msra.mxu0 0
        %977 = vmatprep.subr.bf16.mxu0 0
        %978 = vmatpush1.bf16.msra.mxu0 0
        %979 = vmatprep.subr.bf16.mxu0 0
        %980 = vmatpush1.bf16.msra.mxu0 0
        %981 = vmatprep.subr.bf16.mxu0 0
        %982 = vmatpush1.bf16.msra.mxu0 0
        %983 = vmatprep.mubr.bf16.mxu0 0
        %984 = vmatmul.mubr.bf16.gmra.mrb[0].mxu0 %v900
        %v985 = vpop.f32.mrb[0].mxu0
        %v986 = vadd.f32 %v896, %v985
        %v987 = vpop.f32.mrb[0].mxu0
        %v988 = vpop.f32.mrb[0].mxu0
        %v989 = vadd.f32 %v896, %v988
        %v990 = vpop.f32.mrb[0].mxu0
        %991 = vmatprep.mubr.bf16.mxu0 0
        %992 = vmatmul.mubr.bf16.gmra.mrb[0].mxu0 %v903
        %v993 = vpop.f32.mrb[0].mxu0
        %v994 = vadd.f32 %v896, %v993
        %v995 = vpop.f32.mrb[0].mxu0
        %v996 = vpop.f32.mrb[0].mxu0
        %v997 = vadd.f32 %v896, %v996
        %v998 = vpop.f32.mrb[0].mxu0
        %999 = vmatprep.mubr.bf16.mxu0 0
        %1000 = vmatmul.mubr.bf16.gmra.mrb[0].mxu0 %v906
        %v1001 = vpop.f32.mrb[0].mxu0
        %v1002 = vadd.f32 %v896, %v1001
        %v1003 = vpop.f32.mrb[0].mxu0
        %v1004 = vpop.f32.mrb[0].mxu0
        %v1005 = vadd.f32 %v896, %v1004
        %v1006 = vpop.f32.mrb[0].mxu0
        %1007 = vmatprep.mubr.bf16.mxu0 0
        %1008 = vmatmul.mubr.bf16.gmra.mrb[0].mxu0 %v909
        %v1009 = vpop.f32.mrb[0].mxu0
        %v1010 = vadd.f32 %v896, %v1009
        %v1011 = vpop.f32.mrb[0].mxu0
        %v1012 = vpop.f32.mrb[0].mxu0
        %v1013 = vadd.f32 %v896, %v1012
        %v1014 = vpop.f32.mrb[0].mxu0
        %1015 = vmatprep.mubr.bf16.mxu0 0
        %1016 = vmatmul.mubr.bf16.gmra.mrb[0].mxu0 %v912
        %v1017 = vpop.f32.mrb[0].mxu0
        %v1018 = vadd.f32 %v896, %v1017
        %v1019 = vpop.f32.mrb[0].mxu0
        %v1020 = vpop.f32.mrb[0].mxu0
        %v1021 = vadd.f32 %v896, %v1020
        %v1022 = vpop.f32.mrb[0].mxu0
        %1023 = vmatprep.mubr.bf16.mxu0 0
        %1024 = vmatmul.mubr.bf16.gmra.mrb[0].mxu0 %v915
        %v1025 = vpop.f32.mrb[0].mxu0
        %v1026 = vadd.f32 %v896, %v1025
        %v1027 = vpop.f32.mrb[0].mxu0
        %v1028 = vpop.f32.mrb[0].mxu0
        %v1029 = vadd.f32 %v896, %v1028
        %v1030 = vpop.f32.mrb[0].mxu0
        %1031 = vmatprep.mubr.bf16.mxu0 0
        %1032 = vmatmul.mubr.bf16.gmra.mrb[0].mxu0 %v918
        %v1033 = vpop.f32.mrb[0].mxu0
        %v1034 = vadd.f32 %v896, %v1033
        %v1035 = vpop.f32.mrb[0].mxu0
        %v1036 = vpop.f32.mrb[0].mxu0
        %v1037 = vadd.f32 %v896, %v1036
        %v1038 = vpop.f32.mrb[0].mxu0
        %1039 = vmatprep.mubr.bf16.mxu0 0
        %1040 = vmatmul.mubr.bf16.gmra.mrb[0].mxu0 %v921
        %v1041 = vpop.f32.mrb[0].mxu0
        %v1042 = vadd.f32 %v896, %v1041
        %v1043 = vpop.f32.mrb[0].mxu0
        %v1044 = vpop.f32.mrb[0].mxu0
        %v1045 = vadd.f32 %v896, %v1044
        %v1046 = vpop.f32.mrb[0].mxu0
        %1047 = vmatprep.mubr.bf16.mxu0 0
        %1048 = vmatmul.mubr.bf16.gmra.mrb[0].mxu0 %v924
        %v1049 = vpop.f32.mrb[0].mxu0
        %v1050 = vadd.f32 %v896, %v1049
        %v1051 = vpop.f32.mrb[0].mxu0
        %v1052 = vpop.f32.mrb[0].mxu0
        %v1053 = vadd.f32 %v896, %v1052
        %v1054 = vpop.f32.mrb[0].mxu0
        %1055 = vmatprep.mubr.bf16.mxu0 0
        %1056 = vmatmul.mubr.bf16.gmra.mrb[0].mxu0 %v927
        %v1057 = vpop.f32.mrb[0].mxu0
        %v1058 = vadd.f32 %v896, %v1057
        %v1059 = vpop.f32.mrb[0].mxu0
        %v1060 = vpop.f32.mrb[0].mxu0
        %v1061 = vadd.f32 %v896, %v1060
        %v1062 = vpop.f32.mrb[0].mxu0
        %1063 = vmatprep.mubr.bf16.mxu0 0
        %1064 = vmatmul.mubr.bf16.gmra.mrb[0].mxu0 %v930
        %v1065 = vpop.f32.mrb[0].mxu0
        %v1066 = vadd.f32 %v896, %v1065
        %v1067 = vpop.f32.mrb[0].mxu0
        %v1068 = vpop.f32.mrb[0].mxu0
        %v1069 = vadd.f32 %v896, %v1068
        %v1070 = vpop.f32.mrb[0].mxu0
        %1071 = vmatprep.mubr.bf16.mxu0 0
        %1072 = vmatmul.mubr.bf16.gmra.mrb[0].mxu0 %v933
        %v1073 = vpop.f32.mrb[0].mxu0
        %v1074 = vadd.f32 %v896, %v1073
        %v1075 = vpop.f32.mrb[0].mxu0
        %v1076 = vpop.f32.mrb[0].mxu0
        %v1077 = vadd.f32 %v896, %v1076
        %v1078 = vpop.f32.mrb[0].mxu0
        %1079 = vmatprep.mubr.bf16.mxu0 0
        %1080 = vmatmul.mubr.bf16.gmra.mrb[0].mxu0 %v936
        %v1081 = vpop.f32.mrb[0].mxu0
        %v1082 = vadd.f32 %v896, %v1081
        %v1083 = vpop.f32.mrb[0].mxu0
        %v1084 = vpop.f32.mrb[0].mxu0
        %v1085 = vadd.f32 %v896, %v1084
        %v1086 = vpop.f32.mrb[0].mxu0
        %1087 = vmatprep.mubr.bf16.mxu0 0
        %1088 = vmatmul.mubr.bf16.gmra.mrb[0].mxu0 %v939
        %v1089 = vpop.f32.mrb[0].mxu0
        %v1090 = vadd.f32 %v896, %v1089
        %v1091 = vpop.f32.mrb[0].mxu0
        %v1092 = vpop.f32.mrb[0].mxu0
        %v1093 = vadd.f32 %v896, %v1092
        %v1094 = vpop.f32.mrb[0].mxu0
        %1095 = vmatprep.mubr.bf16.mxu0 0
        %1096 = vmatmul.mubr.bf16.gmra.mrb[0].mxu0 %v942
        %v1097 = vpop.f32.mrb[0].mxu0
        %v1098 = vadd.f32 %v896, %v1097
        %v1099 = vpop.f32.mrb[0].mxu0
        %v1100 = vpop.f32.mrb[0].mxu0
        %v1101 = vadd.f32 %v896, %v1100
        %v1102 = vpop.f32.mrb[0].mxu0
        %1103 = vmatprep.mubr.bf16.mxu0 0
        %1104 = vmatmul.mubr.bf16.gmra.mrb[0].mxu0 %v945
        %v1105 = vpop.f32.mrb[0].mxu0
        %v1106 = vadd.f32 %v896, %v1105
        %v1107 = vpop.f32.mrb[0].mxu0
        %v1108 = vpop.f32.mrb[0].mxu0
        %v1109 = vadd.f32 %v896, %v1108
        %v1110 = vpop.f32.mrb[0].mxu0
        %1111 = vdwg.mxu0
        %vm1112 = vcmp.ge.f32.partialorder %v986, 0.0
        %vm1113 = vcmp.ge.f32.partialorder %v989, 0.0
        %vm1114 = vcmp.ge.f32.partialorder %v994, 0.0
        %vm1115 = vcmp.ge.f32.partialorder %v997, 0.0
        %vm1116 = vcmp.ge.f32.partialorder %v1002, 0.0
        %vm1117 = vcmp.ge.f32.partialorder %v1005, 0.0
        %vm1118 = vcmp.ge.f32.partialorder %v1010, 0.0
        %vm1119 = vcmp.ge.f32.partialorder %v1013, 0.0
        %vm1120 = vcmp.ge.f32.partialorder %v1018, 0.0
        %vm1121 = vcmp.ge.f32.partialorder %v1021, 0.0
        %vm1122 = vcmp.ge.f32.partialorder %v1026, 0.0
        %vm1123 = vcmp.ge.f32.partialorder %v1029, 0.0
        %vm1124 = vcmp.ge.f32.partialorder %v1034, 0.0
        %vm1125 = vcmp.ge.f32.partialorder %v1037, 0.0
        %vm1126 = vcmp.ge.f32.partialorder %v1042, 0.0
        %vm1127 = vcmp.ge.f32.partialorder %v1045, 0.0
        %vm1128 = vcmp.ge.f32.partialorder %v1050, 0.0
        %vm1129 = vcmp.ge.f32.partialorder %v1053, 0.0
        %vm1130 = vcmp.ge.f32.partialorder %v1058, 0.0
        %vm1131 = vcmp.ge.f32.partialorder %v1061, 0.0
        %vm1132 = vcmp.ge.f32.partialorder %v1066, 0.0
        %vm1133 = vcmp.ge.f32.partialorder %v1069, 0.0
        %vm1134 = vcmp.ge.f32.partialorder %v1074, 0.0
        %vm1135 = vcmp.ge.f32.partialorder %v1077, 0.0
        %vm1136 = vcmp.ge.f32.partialorder %v1082, 0.0
        %vm1137 = vcmp.ge.f32.partialorder %v1085, 0.0
        %vm1138 = vcmp.ge.f32.partialorder %v1090, 0.0
        %vm1139 = vcmp.ge.f32.partialorder %v1093, 0.0
        %vm1140 = vcmp.ge.f32.partialorder %v1098, 0.0
        %vm1141 = vcmp.ge.f32.partialorder %v1101, 0.0
        %vm1142 = vcmp.ge.f32.partialorder %v1106, 0.0
        %vm1143 = vcmp.ge.f32.partialorder %v1109, 0.0
        %v1144 = vstv %s441
        %v1145 = vmul.f32 %v1144, %v986
        %v1146 = vmul.f32 %v1144, %v989
        %v1147 = vmul.f32 %v1144, %v994
        %v1148 = vmul.f32 %v1144, %v997
        %v1149 = vmul.f32 %v1144, %v1002
        %v1150 = vmul.f32 %v1144, %v1005
        %v1151 = vmul.f32 %v1144, %v1010
        %v1152 = vmul.f32 %v1144, %v1013
        %v1153 = vmul.f32 %v1144, %v1018
        %v1154 = vmul.f32 %v1144, %v1021
        %v1155 = vmul.f32 %v1144, %v1026
        %v1156 = vmul.f32 %v1144, %v1029
        %v1157 = vmul.f32 %v1144, %v1034
        %v1158 = vmul.f32 %v1144, %v1037
        %v1159 = vmul.f32 %v1144, %v1042
        %v1160 = vmul.f32 %v1144, %v1045
        %v1161 = vmul.f32 %v1144, %v1050
        %v1162 = vmul.f32 %v1144, %v1053
        %v1163 = vmul.f32 %v1144, %v1058
        %v1164 = vmul.f32 %v1144, %v1061
        %v1165 = vmul.f32 %v1144, %v1066
        %v1166 = vmul.f32 %v1144, %v1069
        %v1167 = vmul.f32 %v1144, %v1074
        %v1168 = vmul.f32 %v1144, %v1077
        %v1169 = vmul.f32 %v1144, %v1082
        %v1170 = vmul.f32 %v1144, %v1085
        %v1171 = vmul.f32 %v1144, %v1090
        %v1172 = vmul.f32 %v1144, %v1093
        %v1173 = vmul.f32 %v1144, %v1098
        %v1174 = vmul.f32 %v1144, %v1101
        %v1175 = vmul.f32 %v1144, %v1106
        %v1176 = vmul.f32 %v1144, %v1109
        %v1177 = vsel %vm1112, %v986, %v1145
        %v1178 = vsel %vm1113, %v989, %v1146
        %v1179 = vsel %vm1114, %v994, %v1147
        %v1180 = vsel %vm1115, %v997, %v1148
        %v1181 = vsel %vm1116, %v1002, %v1149
        %v1182 = vsel %vm1117, %v1005, %v1150
        %v1183 = vsel %vm1118, %v1010, %v1151
        %v1184 = vsel %vm1119, %v1013, %v1152
        %v1185 = vsel %vm1120, %v1018, %v1153
        %v1186 = vsel %vm1121, %v1021, %v1154
        %v1187 = vsel %vm1122, %v1026, %v1155
        %v1188 = vsel %vm1123, %v1029, %v1156
        %v1189 = vsel %vm1124, %v1034, %v1157
        %v1190 = vsel %vm1125, %v1037, %v1158
        %v1191 = vsel %vm1126, %v1042, %v1159
        %v1192 = vsel %vm1127, %v1045, %v1160
        %v1193 = vsel %vm1128, %v1050, %v1161
        %v1194 = vsel %vm1129, %v1053, %v1162
        %v1195 = vsel %vm1130, %v1058, %v1163
        %v1196 = vsel %vm1131, %v1061, %v1164
        %v1197 = vsel %vm1132, %v1066, %v1165
        %v1198 = vsel %vm1133, %v1069, %v1166
        %v1199 = vsel %vm1134, %v1074, %v1167
        %v1200 = vsel %vm1135, %v1077, %v1168
        %v1201 = vsel %vm1136, %v1082, %v1169
        %v1202 = vsel %vm1137, %v1085, %v1170
        %v1203 = vsel %vm1138, %v1090, %v1171
        %v1204 = vsel %vm1139, %v1093, %v1172
        %v1205 = vsel %vm1140, %v1098, %v1173
        %v1206 = vsel %vm1141, %v1101, %v1174
        %v1207 = vsel %vm1142, %v1106, %v1175
        %v1208 = vsel %vm1143, %v1109, %v1176
        %v1209 = vpack.c.bf16 %v1178, %v1177
        %v1210 = vpack.c.bf16 %v1180, %v1179
        %v1211 = vpack.c.bf16 %v1182, %v1181
        %v1212 = vpack.c.bf16 %v1184, %v1183
        %v1213 = vpack.c.bf16 %v1186, %v1185
        %v1214 = vpack.c.bf16 %v1188, %v1187
        %v1215 = vpack.c.bf16 %v1190, %v1189
        %v1216 = vpack.c.bf16 %v1192, %v1191
        %v1217 = vpack.c.bf16 %v1194, %v1193
        %v1218 = vpack.c.bf16 %v1196, %v1195
        %v1219 = vpack.c.bf16 %v1198, %v1197
        %v1220 = vpack.c.bf16 %v1200, %v1199
        %v1221 = vpack.c.bf16 %v1202, %v1201
        %v1222 = vpack.c.bf16 %v1204, %v1203
        %v1223 = vpack.c.bf16 %v1206, %v1205
        %v1224 = vpack.c.bf16 %v1208, %v1207
        %v1225 = vld [vmem:[%s7] sm:$0xf]
        %v1226 = vld [vmem:[%s7 + $0x4] sm:$0xf]
        %v1227 = vld [vmem:[%s8] sm:$0x1]
        %v1229 = vlaneseq
        %v1230 = vshrl.u32 %v1229, 7
        %v1231 = vsub.s32 0, %v1230
        %v1232 = vrot.slane %v1227, %v1231
        %v1236 = vunpack.c.l.b16 %v1225
        %v1237 = vunpack.c.l.b16 %v1226
        %v1238 = vpack.c.b16 %v1237, %v1236
        %vm1240 = vcmask 130048
        %v1242 = vsel %vm1240, %v1209, 0
        %v1245 = vsel %vm1240, %v1210, 0
        %v1248 = vsel %vm1240, %v1211, 0
        %v1251 = vsel %vm1240, %v1212, 0
        %v1254 = vsel %vm1240, %v1213, 0
        %v1257 = vsel %vm1240, %v1214, 0
        %v1260 = vsel %vm1240, %v1215, 0
        %v1263 = vsel %vm1240, %v1216, 0
        %v1266 = vsel %vm1240, %v1217, 0
        %v1269 = vsel %vm1240, %v1218, 0
        %v1272 = vsel %vm1240, %v1219, 0
        %v1275 = vsel %vm1240, %v1220, 0
        %v1278 = vsel %vm1240, %v1221, 0
        %v1281 = vsel %vm1240, %v1222, 0
        %v1284 = vsel %vm1240, %v1223, 0
        %v1287 = vsel %vm1240, %v1224, 0
        %1289 = vmatprep.subr.bf16.mxu0 0
        %1290 = vmatpush1.bf16.msra.mxu0 %v1238
        %1291 = vmatprep.subr.bf16.mxu0 0
        %1292 = vmatpush1.bf16.msra.mxu0 0
        %1293 = vmatprep.subr.bf16.mxu0 0
        %1294 = vmatpush1.bf16.msra.mxu0 0
        %1295 = vmatprep.subr.bf16.mxu0 0
        %1296 = vmatpush1.bf16.msra.mxu0 0
        %1297 = vmatprep.subr.bf16.mxu0 0
        %1298 = vmatpush1.bf16.msra.mxu0 0
        %1299 = vmatprep.subr.bf16.mxu0 0
        %1300 = vmatpush1.bf16.msra.mxu0 0
        %1301 = vmatprep.subr.bf16.mxu0 0
        %1302 = vmatpush1.bf16.msra.mxu0 0
        %1303 = vmatprep.subr.bf16.mxu0 0
        %1304 = vmatpush1.bf16.msra.mxu0 0
        %1305 = vmatprep.subr.bf16.mxu0 0
        %1306 = vmatpush1.bf16.msra.mxu0 0
        %1307 = vmatprep.subr.bf16.mxu0 0
        %1308 = vmatpush1.bf16.msra.mxu0 0
        %1309 = vmatprep.subr.bf16.mxu0 0
        %1310 = vmatpush1.bf16.msra.mxu0 0
        %1311 = vmatprep.subr.bf16.mxu0 0
        %1312 = vmatpush1.bf16.msra.mxu0 0
        %1313 = vmatprep.subr.bf16.mxu0 0
        %1314 = vmatpush1.bf16.msra.mxu0 0
        %1315 = vmatprep.subr.bf16.mxu0 0
        %1316 = vmatpush1.bf16.msra.mxu0 0
        %1317 = vmatprep.subr.bf16.mxu0 0
        %1318 = vmatpush1.bf16.msra.mxu0 0
        %1319 = vmatprep.subr.bf16.mxu0 0
        %1320 = vmatpush1.bf16.msra.mxu0 0
        %1321 = vmatprep.mubr.bf16.mxu0 0
        %1322 = vmatmul.mubr.bf16.gmra.mrb[0].mxu0 %v1242
        %v1323 = vpop.f32.mrb[0].mxu0
        %v1324 = vadd.f32 %v1232, %v1323
        %v1325 = vpop.f32.mrb[0].mxu0
        %v1326 = vpop.f32.mrb[0].mxu0
        %v1327 = vadd.f32 %v1232, %v1326
        %v1328 = vpop.f32.mrb[0].mxu0
        %1329 = vmatprep.mubr.bf16.mxu0 0
        %1330 = vmatmul.mubr.bf16.gmra.mrb[0].mxu0 %v1245
        %v1331 = vpop.f32.mrb[0].mxu0
        %v1332 = vadd.f32 %v1232, %v1331
        %v1333 = vpop.f32.mrb[0].mxu0
        %v1334 = vpop.f32.mrb[0].mxu0
        %v1335 = vadd.f32 %v1232, %v1334
        %v1336 = vpop.f32.mrb[0].mxu0
        %1337 = vmatprep.mubr.bf16.mxu0 0
        %1338 = vmatmul.mubr.bf16.gmra.mrb[0].mxu0 %v1248
        %v1339 = vpop.f32.mrb[0].mxu0
        %v1340 = vadd.f32 %v1232, %v1339
        %v1341 = vpop.f32.mrb[0].mxu0
        %v1342 = vpop.f32.mrb[0].mxu0
        %v1343 = vadd.f32 %v1232, %v1342
        %v1344 = vpop.f32.mrb[0].mxu0
        %1345 = vmatprep.mubr.bf16.mxu0 0
        %1346 = vmatmul.mubr.bf16.gmra.mrb[0].mxu0 %v1251
        %v1347 = vpop.f32.mrb[0].mxu0
        %v1348 = vadd.f32 %v1232, %v1347
        %v1349 = vpop.f32.mrb[0].mxu0
        %v1350 = vpop.f32.mrb[0].mxu0
        %v1351 = vadd.f32 %v1232, %v1350
        %v1352 = vpop.f32.mrb[0].mxu0
        %1353 = vmatprep.mubr.bf16.mxu0 0
        %1354 = vmatmul.mubr.bf16.gmra.mrb[0].mxu0 %v1254
        %v1355 = vpop.f32.mrb[0].mxu0
        %v1356 = vadd.f32 %v1232, %v1355
        %v1357 = vpop.f32.mrb[0].mxu0
        %v1358 = vpop.f32.mrb[0].mxu0
        %v1359 = vadd.f32 %v1232, %v1358
        %v1360 = vpop.f32.mrb[0].mxu0
        %1361 = vmatprep.mubr.bf16.mxu0 0
        %1362 = vmatmul.mubr.bf16.gmra.mrb[0].mxu0 %v1257
        %v1363 = vpop.f32.mrb[0].mxu0
        %v1364 = vadd.f32 %v1232, %v1363
        %v1365 = vpop.f32.mrb[0].mxu0
        %v1366 = vpop.f32.mrb[0].mxu0
        %v1367 = vadd.f32 %v1232, %v1366
        %v1368 = vpop.f32.mrb[0].mxu0
        %1369 = vmatprep.mubr.bf16.mxu0 0
        %1370 = vmatmul.mubr.bf16.gmra.mrb[0].mxu0 %v1260
        %v1371 = vpop.f32.mrb[0].mxu0
        %v1372 = vadd.f32 %v1232, %v1371
        %v1373 = vpop.f32.mrb[0].mxu0
        %v1374 = vpop.f32.mrb[0].mxu0
        %v1375 = vadd.f32 %v1232, %v1374
        %v1376 = vpop.f32.mrb[0].mxu0
        %1377 = vmatprep.mubr.bf16.mxu0 0
        %1378 = vmatmul.mubr.bf16.gmra.mrb[0].mxu0 %v1263
        %v1379 = vpop.f32.mrb[0].mxu0
        %v1380 = vadd.f32 %v1232, %v1379
        %v1381 = vpop.f32.mrb[0].mxu0
        %v1382 = vpop.f32.mrb[0].mxu0
        %v1383 = vadd.f32 %v1232, %v1382
        %v1384 = vpop.f32.mrb[0].mxu0
        %1385 = vmatprep.mubr.bf16.mxu0 0
        %1386 = vmatmul.mubr.bf16.gmra.mrb[0].mxu0 %v1266
        %v1387 = vpop.f32.mrb[0].mxu0
        %v1388 = vadd.f32 %v1232, %v1387
        %v1389 = vpop.f32.mrb[0].mxu0
        %v1390 = vpop.f32.mrb[0].mxu0
        %v1391 = vadd.f32 %v1232, %v1390
        %v1392 = vpop.f32.mrb[0].mxu0
        %1393 = vmatprep.mubr.bf16.mxu0 0
        %1394 = vmatmul.mubr.bf16.gmra.mrb[0].mxu0 %v1269
        %v1395 = vpop.f32.mrb[0].mxu0
        %v1396 = vadd.f32 %v1232, %v1395
        %v1397 = vpop.f32.mrb[0].mxu0
        %v1398 = vpop.f32.mrb[0].mxu0
        %v1399 = vadd.f32 %v1232, %v1398
        %v1400 = vpop.f32.mrb[0].mxu0
        %1401 = vmatprep.mubr.bf16.mxu0 0
        %1402 = vmatmul.mubr.bf16.gmra.mrb[0].mxu0 %v1272
        %v1403 = vpop.f32.mrb[0].mxu0
        %v1404 = vadd.f32 %v1232, %v1403
        %v1405 = vpop.f32.mrb[0].mxu0
        %v1406 = vpop.f32.mrb[0].mxu0
        %v1407 = vadd.f32 %v1232, %v1406
        %v1408 = vpop.f32.mrb[0].mxu0
        %1409 = vmatprep.mubr.bf16.mxu0 0
        %1410 = vmatmul.mubr.bf16.gmra.mrb[0].mxu0 %v1275
        %v1411 = vpop.f32.mrb[0].mxu0
        %v1412 = vadd.f32 %v1232, %v1411
        %v1413 = vpop.f32.mrb[0].mxu0
        %v1414 = vpop.f32.mrb[0].mxu0
        %v1415 = vadd.f32 %v1232, %v1414
        %v1416 = vpop.f32.mrb[0].mxu0
        %1417 = vmatprep.mubr.bf16.mxu0 0
        %1418 = vmatmul.mubr.bf16.gmra.mrb[0].mxu0 %v1278
        %v1419 = vpop.f32.mrb[0].mxu0
        %v1420 = vadd.f32 %v1232, %v1419
        %v1421 = vpop.f32.mrb[0].mxu0
        %v1422 = vpop.f32.mrb[0].mxu0
        %v1423 = vadd.f32 %v1232, %v1422
        %v1424 = vpop.f32.mrb[0].mxu0
        %1425 = vmatprep.mubr.bf16.mxu0 0
        %1426 = vmatmul.mubr.bf16.gmra.mrb[0].mxu0 %v1281
        %v1427 = vpop.f32.mrb[0].mxu0
        %v1428 = vadd.f32 %v1232, %v1427
        %v1429 = vpop.f32.mrb[0].mxu0
        %v1430 = vpop.f32.mrb[0].mxu0
        %v1431 = vadd.f32 %v1232, %v1430
        %v1432 = vpop.f32.mrb[0].mxu0
        %1433 = vmatprep.mubr.bf16.mxu0 0
        %1434 = vmatmul.mubr.bf16.gmra.mrb[0].mxu0 %v1284
        %v1435 = vpop.f32.mrb[0].mxu0
        %v1436 = vadd.f32 %v1232, %v1435
        %v1437 = vpop.f32.mrb[0].mxu0
        %v1438 = vpop.f32.mrb[0].mxu0
        %v1439 = vadd.f32 %v1232, %v1438
        %v1440 = vpop.f32.mrb[0].mxu0
        %1441 = vmatprep.mubr.bf16.mxu0 0
        %1442 = vmatmul.mubr.bf16.gmra.mrb[0].mxu0 %v1287
        %v1443 = vpop.f32.mrb[0].mxu0
        %v1444 = vadd.f32 %v1232, %v1443
        %v1445 = vpop.f32.mrb[0].mxu0
        %v1446 = vpop.f32.mrb[0].mxu0
        %v1447 = vadd.f32 %v1232, %v1446
        %v1448 = vpop.f32.mrb[0].mxu0
        %1449 = vdwg.mxu0
        %1482 = vrot.lane.b32.xlu0 %v651, 124
        %v1483 = vpop.permute.xlu0 %1482
        %1484 = vrot.lane.b32.xlu0 %v654, 124
        %v1485 = vpop.permute.xlu0 %1484
        %1486 = vrot.lane.b32.xlu0 %v659, 124
        %v1487 = vpop.permute.xlu0 %1486
        %1488 = vrot.lane.b32.xlu0 %v662, 124
        %v1489 = vpop.permute.xlu0 %1488
        %1490 = vrot.lane.b32.xlu0 %v667, 124
        %v1491 = vpop.permute.xlu0 %1490
        %1492 = vrot.lane.b32.xlu0 %v670, 124
        %v1493 = vpop.permute.xlu0 %1492
        %1494 = vrot.lane.b32.xlu0 %v675, 124
        %v1495 = vpop.permute.xlu0 %1494
        %1496 = vrot.lane.b32.xlu0 %v678, 124
        %v1497 = vpop.permute.xlu0 %1496
        %1498 = vrot.lane.b32.xlu0 %v683, 124
        %v1499 = vpop.permute.xlu0 %1498
        %1500 = vrot.lane.b32.xlu0 %v686, 124
        %v1501 = vpop.permute.xlu0 %1500
        %1502 = vrot.lane.b32.xlu0 %v691, 124
        %v1503 = vpop.permute.xlu0 %1502
        %1504 = vrot.lane.b32.xlu0 %v694, 124
        %v1505 = vpop.permute.xlu0 %1504
        %1506 = vrot.lane.b32.xlu0 %v699, 124
        %v1507 = vpop.permute.xlu0 %1506
        %1508 = vrot.lane.b32.xlu0 %v702, 124
        %v1509 = vpop.permute.xlu0 %1508
        %1510 = vrot.lane.b32.xlu0 %v707, 124
        %v1511 = vpop.permute.xlu0 %1510
        %1512 = vrot.lane.b32.xlu0 %v710, 124
        %v1513 = vpop.permute.xlu0 %1512
        %1514 = vrot.lane.b32.xlu0 %v715, 124
        %v1515 = vpop.permute.xlu0 %1514
        %1516 = vrot.lane.b32.xlu0 %v718, 124
        %v1517 = vpop.permute.xlu0 %1516
        %1518 = vrot.lane.b32.xlu0 %v723, 124
        %v1519 = vpop.permute.xlu0 %1518
        %1520 = vrot.lane.b32.xlu0 %v726, 124
        %v1521 = vpop.permute.xlu0 %1520
        %1522 = vrot.lane.b32.xlu0 %v731, 124
        %v1523 = vpop.permute.xlu0 %1522
        %1524 = vrot.lane.b32.xlu0 %v734, 124
        %v1525 = vpop.permute.xlu0 %1524
        %1526 = vrot.lane.b32.xlu0 %v739, 124
        %v1527 = vpop.permute.xlu0 %1526
        %1528 = vrot.lane.b32.xlu0 %v742, 124
        %v1529 = vpop.permute.xlu0 %1528
        %1530 = vrot.lane.b32.xlu0 %v747, 124
        %v1531 = vpop.permute.xlu0 %1530
        %1532 = vrot.lane.b32.xlu0 %v750, 124
        %v1533 = vpop.permute.xlu0 %1532
        %1534 = vrot.lane.b32.xlu0 %v755, 124
        %v1535 = vpop.permute.xlu0 %1534
        %1536 = vrot.lane.b32.xlu0 %v758, 124
        %v1537 = vpop.permute.xlu0 %1536
        %1538 = vrot.lane.b32.xlu0 %v763, 124
        %v1539 = vpop.permute.xlu0 %1538
        %1540 = vrot.lane.b32.xlu0 %v766, 124
        %v1541 = vpop.permute.xlu0 %1540
        %1542 = vrot.lane.b32.xlu0 %v771, 124
        %v1543 = vpop.permute.xlu0 %1542
        %1544 = vrot.lane.b32.xlu0 %v774, 124
        %v1545 = vpop.permute.xlu0 %1544
        %1578 = vrot.lane.b32.xlu0 %v651, 28
        %v1579 = vpop.permute.xlu0 %1578
        %1580 = vrot.lane.b32.xlu0 %v654, 28
        %v1581 = vpop.permute.xlu0 %1580
        %1582 = vrot.lane.b32.xlu0 %v659, 28
        %v1583 = vpop.permute.xlu0 %1582
        %1584 = vrot.lane.b32.xlu0 %v662, 28
        %v1585 = vpop.permute.xlu0 %1584
        %1586 = vrot.lane.b32.xlu0 %v667, 28
        %v1587 = vpop.permute.xlu0 %1586
        %1588 = vrot.lane.b32.xlu0 %v670, 28
        %v1589 = vpop.permute.xlu0 %1588
        %1590 = vrot.lane.b32.xlu0 %v675, 28
        %v1591 = vpop.permute.xlu0 %1590
        %1592 = vrot.lane.b32.xlu0 %v678, 28
        %v1593 = vpop.permute.xlu0 %1592
        %1594 = vrot.lane.b32.xlu0 %v683, 28
        %v1595 = vpop.permute.xlu0 %1594
        %1596 = vrot.lane.b32.xlu0 %v686, 28
        %v1597 = vpop.permute.xlu0 %1596
        %1598 = vrot.lane.b32.xlu0 %v691, 28
        %v1599 = vpop.permute.xlu0 %1598
        %1600 = vrot.lane.b32.xlu0 %v694, 28
        %v1601 = vpop.permute.xlu0 %1600
        %1602 = vrot.lane.b32.xlu0 %v699, 28
        %v1603 = vpop.permute.xlu0 %1602
        %1604 = vrot.lane.b32.xlu0 %v702, 28
        %v1605 = vpop.permute.xlu0 %1604
        %1606 = vrot.lane.b32.xlu0 %v707, 28
        %v1607 = vpop.permute.xlu0 %1606
        %1608 = vrot.lane.b32.xlu0 %v710, 28
        %v1609 = vpop.permute.xlu0 %1608
        %1610 = vrot.lane.b32.xlu0 %v715, 28
        %v1611 = vpop.permute.xlu0 %1610
        %1612 = vrot.lane.b32.xlu0 %v718, 28
        %v1613 = vpop.permute.xlu0 %1612
        %1614 = vrot.lane.b32.xlu0 %v723, 28
        %v1615 = vpop.permute.xlu0 %1614
        %1616 = vrot.lane.b32.xlu0 %v726, 28
        %v1617 = vpop.permute.xlu0 %1616
        %1618 = vrot.lane.b32.xlu0 %v731, 28
        %v1619 = vpop.permute.xlu0 %1618
        %1620 = vrot.lane.b32.xlu0 %v734, 28
        %v1621 = vpop.permute.xlu0 %1620
        %1622 = vrot.lane.b32.xlu0 %v739, 28
        %v1623 = vpop.permute.xlu0 %1622
        %1624 = vrot.lane.b32.xlu0 %v742, 28
        %v1625 = vpop.permute.xlu0 %1624
        %1626 = vrot.lane.b32.xlu0 %v747, 28
        %v1627 = vpop.permute.xlu0 %1626
        %1628 = vrot.lane.b32.xlu0 %v750, 28
        %v1629 = vpop.permute.xlu0 %1628
        %1630 = vrot.lane.b32.xlu0 %v755, 28
        %v1631 = vpop.permute.xlu0 %1630
        %1632 = vrot.lane.b32.xlu0 %v758, 28
        %v1633 = vpop.permute.xlu0 %1632
        %1634 = vrot.lane.b32.xlu0 %v763, 28
        %v1635 = vpop.permute.xlu0 %1634
        %1636 = vrot.lane.b32.xlu0 %v766, 28
        %v1637 = vpop.permute.xlu0 %1636
        %1638 = vrot.lane.b32.xlu0 %v771, 28
        %v1639 = vpop.permute.xlu0 %1638
        %1640 = vrot.lane.b32.xlu0 %v774, 28
        %v1641 = vpop.permute.xlu0 %1640
        %1674 = vrot.lane.b32.xlu0 %v651, 60
        %v1675 = vpop.permute.xlu0 %1674
        %1676 = vrot.lane.b32.xlu0 %v654, 60
        %v1677 = vpop.permute.xlu0 %1676
        %1678 = vrot.lane.b32.xlu0 %v659, 60
        %v1679 = vpop.permute.xlu0 %1678
        %1680 = vrot.lane.b32.xlu0 %v662, 60
        %v1681 = vpop.permute.xlu0 %1680
        %1682 = vrot.lane.b32.xlu0 %v667, 60
        %v1683 = vpop.permute.xlu0 %1682
        %1684 = vrot.lane.b32.xlu0 %v670, 60
        %v1685 = vpop.permute.xlu0 %1684
        %1686 = vrot.lane.b32.xlu0 %v675, 60
        %v1687 = vpop.permute.xlu0 %1686
        %1688 = vrot.lane.b32.xlu0 %v678, 60
        %v1689 = vpop.permute.xlu0 %1688
        %1690 = vrot.lane.b32.xlu0 %v683, 60
        %v1691 = vpop.permute.xlu0 %1690
        %1692 = vrot.lane.b32.xlu0 %v686, 60
        %v1693 = vpop.permute.xlu0 %1692
        %1694 = vrot.lane.b32.xlu0 %v691, 60
        %v1695 = vpop.permute.xlu0 %1694
        %1696 = vrot.lane.b32.xlu0 %v694, 60
        %v1697 = vpop.permute.xlu0 %1696
        %1698 = vrot.lane.b32.xlu0 %v699, 60
        %v1699 = vpop.permute.xlu0 %1698
        %1700 = vrot.lane.b32.xlu0 %v702, 60
        %v1701 = vpop.permute.xlu0 %1700
        %1702 = vrot.lane.b32.xlu0 %v707, 60
        %v1703 = vpop.permute.xlu0 %1702
        %1704 = vrot.lane.b32.xlu0 %v710, 60
        %v1705 = vpop.permute.xlu0 %1704
        %1706 = vrot.lane.b32.xlu0 %v715, 60
        %v1707 = vpop.permute.xlu0 %1706
        %1708 = vrot.lane.b32.xlu0 %v718, 60
        %v1709 = vpop.permute.xlu0 %1708
        %1710 = vrot.lane.b32.xlu0 %v723, 60
        %v1711 = vpop.permute.xlu0 %1710
        %1712 = vrot.lane.b32.xlu0 %v726, 60
        %v1713 = vpop.permute.xlu0 %1712
        %1714 = vrot.lane.b32.xlu0 %v731, 60
        %v1715 = vpop.permute.xlu0 %1714
        %1716 = vrot.lane.b32.xlu0 %v734, 60
        %v1717 = vpop.permute.xlu0 %1716
        %1718 = vrot.lane.b32.xlu0 %v739, 60
        %v1719 = vpop.permute.xlu0 %1718
        %1720 = vrot.lane.b32.xlu0 %v742, 60
        %v1721 = vpop.permute.xlu0 %1720
        %1722 = vrot.lane.b32.xlu0 %v747, 60
        %v1723 = vpop.permute.xlu0 %1722
        %1724 = vrot.lane.b32.xlu0 %v750, 60
        %v1725 = vpop.permute.xlu0 %1724
        %1726 = vrot.lane.b32.xlu0 %v755, 60
        %v1727 = vpop.permute.xlu0 %1726
        %1728 = vrot.lane.b32.xlu0 %v758, 60
        %v1729 = vpop.permute.xlu0 %1728
        %1730 = vrot.lane.b32.xlu0 %v763, 60
        %v1731 = vpop.permute.xlu0 %1730
        %1732 = vrot.lane.b32.xlu0 %v766, 60
        %v1733 = vpop.permute.xlu0 %1732
        %1734 = vrot.lane.b32.xlu0 %v771, 60
        %v1735 = vpop.permute.xlu0 %1734
        %1736 = vrot.lane.b32.xlu0 %v774, 60
        %v1737 = vpop.permute.xlu0 %1736
        %1770 = vrot.lane.b32.xlu0 %v651, 92
        %v1771 = vpop.permute.xlu0 %1770
        %1772 = vrot.lane.b32.xlu0 %v654, 92
        %v1773 = vpop.permute.xlu0 %1772
        %1774 = vrot.lane.b32.xlu0 %v659, 92
        %v1775 = vpop.permute.xlu0 %1774
        %1776 = vrot.lane.b32.xlu0 %v662, 92
        %v1777 = vpop.permute.xlu0 %1776
        %1778 = vrot.lane.b32.xlu0 %v667, 92
        %v1779 = vpop.permute.xlu0 %1778
        %1780 = vrot.lane.b32.xlu0 %v670, 92
        %v1781 = vpop.permute.xlu0 %1780
        %1782 = vrot.lane.b32.xlu0 %v675, 92
        %v1783 = vpop.permute.xlu0 %1782
        %1784 = vrot.lane.b32.xlu0 %v678, 92
        %v1785 = vpop.permute.xlu0 %1784
        %1786 = vrot.lane.b32.xlu0 %v683, 92
        %v1787 = vpop.permute.xlu0 %1786
        %1788 = vrot.lane.b32.xlu0 %v686, 92
        %v1789 = vpop.permute.xlu0 %1788
        %1790 = vrot.lane.b32.xlu0 %v691, 92
        %v1791 = vpop.permute.xlu0 %1790
        %1792 = vrot.lane.b32.xlu0 %v694, 92
        %v1793 = vpop.permute.xlu0 %1792
        %1794 = vrot.lane.b32.xlu0 %v699, 92
        %v1795 = vpop.permute.xlu0 %1794
        %1796 = vrot.lane.b32.xlu0 %v702, 92
        %v1797 = vpop.permute.xlu0 %1796
        %1798 = vrot.lane.b32.xlu0 %v707, 92
        %v1799 = vpop.permute.xlu0 %1798
        %1800 = vrot.lane.b32.xlu0 %v710, 92
        %v1801 = vpop.permute.xlu0 %1800
        %1802 = vrot.lane.b32.xlu0 %v715, 92
        %v1803 = vpop.permute.xlu0 %1802
        %1804 = vrot.lane.b32.xlu0 %v718, 92
        %v1805 = vpop.permute.xlu0 %1804
        %1806 = vrot.lane.b32.xlu0 %v723, 92
        %v1807 = vpop.permute.xlu0 %1806
        %1808 = vrot.lane.b32.xlu0 %v726, 92
        %v1809 = vpop.permute.xlu0 %1808
        %1810 = vrot.lane.b32.xlu0 %v731, 92
        %v1811 = vpop.permute.xlu0 %1810
        %1812 = vrot.lane.b32.xlu0 %v734, 92
        %v1813 = vpop.permute.xlu0 %1812
        %1814 = vrot.lane.b32.xlu0 %v739, 92
        %v1815 = vpop.permute.xlu0 %1814
        %1816 = vrot.lane.b32.xlu0 %v742, 92
        %v1817 = vpop.permute.xlu0 %1816
        %1818 = vrot.lane.b32.xlu0 %v747, 92
        %v1819 = vpop.permute.xlu0 %1818
        %1820 = vrot.lane.b32.xlu0 %v750, 92
        %v1821 = vpop.permute.xlu0 %1820
        %1822 = vrot.lane.b32.xlu0 %v755, 92
        %v1823 = vpop.permute.xlu0 %1822
        %1824 = vrot.lane.b32.xlu0 %v758, 92
        %v1825 = vpop.permute.xlu0 %1824
        %1826 = vrot.lane.b32.xlu0 %v763, 92
        %v1827 = vpop.permute.xlu0 %1826
        %1828 = vrot.lane.b32.xlu0 %v766, 92
        %v1829 = vpop.permute.xlu0 %1828
        %1830 = vrot.lane.b32.xlu0 %v771, 92
        %v1831 = vpop.permute.xlu0 %1830
        %1832 = vrot.lane.b32.xlu0 %v774, 92
        %v1833 = vpop.permute.xlu0 %1832
        %vm1866 = vcmask 261120
        %v1867 = vsel %vm1866, %v1483, %v1579
        %v1868 = vsel %vm1866, %v1485, %v1581
        %v1869 = vsel %vm1866, %v1487, %v1583
        %v1870 = vsel %vm1866, %v1489, %v1585
        %v1871 = vsel %vm1866, %v1491, %v1587
        %v1872 = vsel %vm1866, %v1493, %v1589
        %v1873 = vsel %vm1866, %v1495, %v1591
        %v1874 = vsel %vm1866, %v1497, %v1593
        %v1875 = vsel %vm1866, %v1499, %v1595
        %v1876 = vsel %vm1866, %v1501, %v1597
        %v1877 = vsel %vm1866, %v1503, %v1599
        %v1878 = vsel %vm1866, %v1505, %v1601
        %v1879 = vsel %vm1866, %v1507, %v1603
        %v1880 = vsel %vm1866, %v1509, %v1605
        %v1881 = vsel %vm1866, %v1511, %v1607
        %v1882 = vsel %vm1866, %v1513, %v1609
        %v1883 = vsel %vm1866, %v1515, %v1611
        %v1884 = vsel %vm1866, %v1517, %v1613
        %v1885 = vsel %vm1866, %v1519, %v1615
        %v1886 = vsel %vm1866, %v1521, %v1617
        %v1887 = vsel %vm1866, %v1523, %v1619
        %v1888 = vsel %vm1866, %v1525, %v1621
        %v1889 = vsel %vm1866, %v1527, %v1623
        %v1890 = vsel %vm1866, %v1529, %v1625
        %v1891 = vsel %vm1866, %v1531, %v1627
        %v1892 = vsel %vm1866, %v1533, %v1629
        %v1893 = vsel %vm1866, %v1535, %v1631
        %v1894 = vsel %vm1866, %v1537, %v1633
        %v1895 = vsel %vm1866, %v1539, %v1635
        %v1896 = vsel %vm1866, %v1541, %v1637
        %v1897 = vsel %vm1866, %v1543, %v1639
        %v1898 = vsel %vm1866, %v1545, %v1641
        %vm1899 = vcmask 523264
        %v1900 = vsel %vm1899, %v1867, %v1675
        %v1901 = vsel %vm1899, %v1868, %v1677
        %v1902 = vsel %vm1899, %v1869, %v1679
        %v1903 = vsel %vm1899, %v1870, %v1681
        %v1904 = vsel %vm1899, %v1871, %v1683
        %v1905 = vsel %vm1899, %v1872, %v1685
        %v1906 = vsel %vm1899, %v1873, %v1687
        %v1907 = vsel %vm1899, %v1874, %v1689
        %v1908 = vsel %vm1899, %v1875, %v1691
        %v1909 = vsel %vm1899, %v1876, %v1693
        %v1910 = vsel %vm1899, %v1877, %v1695
        %v1911 = vsel %vm1899, %v1878, %v1697
        %v1912 = vsel %vm1899, %v1879, %v1699
        %v1913 = vsel %vm1899, %v1880, %v1701
        %v1914 = vsel %vm1899, %v1881, %v1703
        %v1915 = vsel %vm1899, %v1882, %v1705
        %v1916 = vsel %vm1899, %v1883, %v1707
        %v1917 = vsel %vm1899, %v1884, %v1709
        %v1918 = vsel %vm1899, %v1885, %v1711
        %v1919 = vsel %vm1899, %v1886, %v1713
        %v1920 = vsel %vm1899, %v1887, %v1715
        %v1921 = vsel %vm1899, %v1888, %v1717
        %v1922 = vsel %vm1899, %v1889, %v1719
        %v1923 = vsel %vm1899, %v1890, %v1721
        %v1924 = vsel %vm1899, %v1891, %v1723
        %v1925 = vsel %vm1899, %v1892, %v1725
        %v1926 = vsel %vm1899, %v1893, %v1727
        %v1927 = vsel %vm1899, %v1894, %v1729
        %v1928 = vsel %vm1899, %v1895, %v1731
        %v1929 = vsel %vm1899, %v1896, %v1733
        %v1930 = vsel %vm1899, %v1897, %v1735
        %v1931 = vsel %vm1899, %v1898, %v1737
        %vm1932 = vcmask 785408
        %v1933 = vsel %vm1932, %v1900, %v1771
        %v1934 = vsel %vm1932, %v1901, %v1773
        %v1935 = vsel %vm1932, %v1902, %v1775
        %v1936 = vsel %vm1932, %v1903, %v1777
        %v1937 = vsel %vm1932, %v1904, %v1779
        %v1938 = vsel %vm1932, %v1905, %v1781
        %v1939 = vsel %vm1932, %v1906, %v1783
        %v1940 = vsel %vm1932, %v1907, %v1785
        %v1941 = vsel %vm1932, %v1908, %v1787
        %v1942 = vsel %vm1932, %v1909, %v1789
        %v1943 = vsel %vm1932, %v1910, %v1791
        %v1944 = vsel %vm1932, %v1911, %v1793
        %v1945 = vsel %vm1932, %v1912, %v1795
        %v1946 = vsel %vm1932, %v1913, %v1797
        %v1947 = vsel %vm1932, %v1914, %v1799
        %v1948 = vsel %vm1932, %v1915, %v1801
        %v1949 = vsel %vm1932, %v1916, %v1803
        %v1950 = vsel %vm1932, %v1917, %v1805
        %v1951 = vsel %vm1932, %v1918, %v1807
        %v1952 = vsel %vm1932, %v1919, %v1809
        %v1953 = vsel %vm1932, %v1920, %v1811
        %v1954 = vsel %vm1932, %v1921, %v1813
        %v1955 = vsel %vm1932, %v1922, %v1815
        %v1956 = vsel %vm1932, %v1923, %v1817
        %v1957 = vsel %vm1932, %v1924, %v1819
        %v1958 = vsel %vm1932, %v1925, %v1821
        %v1959 = vsel %vm1932, %v1926, %v1823
        %v1960 = vsel %vm1932, %v1927, %v1825
        %v1961 = vsel %vm1932, %v1928, %v1827
        %v1962 = vsel %vm1932, %v1929, %v1829
        %v1963 = vsel %vm1932, %v1930, %v1831
        %v1964 = vsel %vm1932, %v1931, %v1833
        %v1965 = vld [vmem:[%s436] sm:$0xff]
        %v1966 = vld [vmem:[%s436 + $0x8] sm:$0xff]
        %v1967 = vld [vmem:[%s436 + $0x10] sm:$0xff]
        %v1968 = vld [vmem:[%s436 + $0x18] sm:$0xff]
        %v1969 = vld [vmem:[%s436 + $0x20] sm:$0xff]
        %v1970 = vld [vmem:[%s436 + $0x28] sm:$0xff]
        %v1971 = vld [vmem:[%s436 + $0x30] sm:$0xff]
        %v1972 = vld [vmem:[%s436 + $0x38] sm:$0xff]
        %v1973 = vunpack.c.0.s8 %v1965
        %v1974 = vunpack.c.1.s8 %v1965
        %v1975 = vunpack.c.2.s8 %v1965
        %v1976 = vunpack.c.3.s8 %v1965
        %v1977 = vunpack.c.0.s8 %v1966
        %v1978 = vunpack.c.1.s8 %v1966
        %v1979 = vunpack.c.2.s8 %v1966
        %v1980 = vunpack.c.3.s8 %v1966
        %v1981 = vunpack.c.0.s8 %v1967
        %v1982 = vunpack.c.1.s8 %v1967
        %v1983 = vunpack.c.2.s8 %v1967
        %v1984 = vunpack.c.3.s8 %v1967
        %v1985 = vunpack.c.0.s8 %v1968
        %v1986 = vunpack.c.1.s8 %v1968
        %v1987 = vunpack.c.2.s8 %v1968
        %v1988 = vunpack.c.3.s8 %v1968
        %v1989 = vunpack.c.0.s8 %v1969
        %v1990 = vunpack.c.1.s8 %v1969
        %v1991 = vunpack.c.2.s8 %v1969
        %v1992 = vunpack.c.3.s8 %v1969
        %v1993 = vunpack.c.0.s8 %v1970
        %v1994 = vunpack.c.1.s8 %v1970
        %v1995 = vunpack.c.2.s8 %v1970
        %v1996 = vunpack.c.3.s8 %v1970
        %v1997 = vunpack.c.0.s8 %v1971
        %v1998 = vunpack.c.1.s8 %v1971
        %v1999 = vunpack.c.2.s8 %v1971
        %v2000 = vunpack.c.3.s8 %v1971
        %v2001 = vunpack.c.0.s8 %v1972
        %v2002 = vunpack.c.1.s8 %v1972
        %v2003 = vunpack.c.2.s8 %v1972
        %v2004 = vunpack.c.3.s8 %v1972
        %2005 = vrot.lane.b32.xlu0 %v1973, 32
        %v2006 = vpop.permute.xlu0 %2005
        %2007 = vrot.lane.b32.xlu0 %v1974, 32
        %v2008 = vpop.permute.xlu0 %2007
        %2009 = vrot.lane.b32.xlu0 %v1975, 32
        %v2010 = vpop.permute.xlu0 %2009
        %2011 = vrot.lane.b32.xlu0 %v1976, 32
        %v2012 = vpop.permute.xlu0 %2011
        %2013 = vrot.lane.b32.xlu0 %v1977, 32
        %v2014 = vpop.permute.xlu0 %2013
        %2015 = vrot.lane.b32.xlu0 %v1978, 32
        %v2016 = vpop.permute.xlu0 %2015
        %2017 = vrot.lane.b32.xlu0 %v1979, 32
        %v2018 = vpop.permute.xlu0 %2017
        %2019 = vrot.lane.b32.xlu0 %v1980, 32
        %v2020 = vpop.permute.xlu0 %2019
        %2021 = vrot.lane.b32.xlu0 %v1981, 32
        %v2022 = vpop.permute.xlu0 %2021
        %2023 = vrot.lane.b32.xlu0 %v1982, 32
        %v2024 = vpop.permute.xlu0 %2023
        %2025 = vrot.lane.b32.xlu0 %v1983, 32
        %v2026 = vpop.permute.xlu0 %2025
        %2027 = vrot.lane.b32.xlu0 %v1984, 32
        %v2028 = vpop.permute.xlu0 %2027
        %2029 = vrot.lane.b32.xlu0 %v1985, 32
        %v2030 = vpop.permute.xlu0 %2029
        %2031 = vrot.lane.b32.xlu0 %v1986, 32
        %v2032 = vpop.permute.xlu0 %2031
        %2033 = vrot.lane.b32.xlu0 %v1987, 32
        %v2034 = vpop.permute.xlu0 %2033
        %2035 = vrot.lane.b32.xlu0 %v1988, 32
        %v2036 = vpop.permute.xlu0 %2035
        %2037 = vrot.lane.b32.xlu0 %v1989, 32
        %v2038 = vpop.permute.xlu0 %2037
        %2039 = vrot.lane.b32.xlu0 %v1990, 32
        %v2040 = vpop.permute.xlu0 %2039
        %2041 = vrot.lane.b32.xlu0 %v1991, 32
        %v2042 = vpop.permute.xlu0 %2041
        %2043 = vrot.lane.b32.xlu0 %v1992, 32
        %v2044 = vpop.permute.xlu0 %2043
        %2045 = vrot.lane.b32.xlu0 %v1993, 32
        %v2046 = vpop.permute.xlu0 %2045
        %2047 = vrot.lane.b32.xlu0 %v1994, 32
        %v2048 = vpop.permute.xlu0 %2047
        %2049 = vrot.lane.b32.xlu0 %v1995, 32
        %v2050 = vpop.permute.xlu0 %2049
        %2051 = vrot.lane.b32.xlu0 %v1996, 32
        %v2052 = vpop.permute.xlu0 %2051
        %2053 = vrot.lane.b32.xlu0 %v1997, 32
        %v2054 = vpop.permute.xlu0 %2053
        %2055 = vrot.lane.b32.xlu0 %v1998, 32
        %v2056 = vpop.permute.xlu0 %2055
        %2057 = vrot.lane.b32.xlu0 %v1999, 32
        %v2058 = vpop.permute.xlu0 %2057
        %2059 = vrot.lane.b32.xlu0 %v2000, 32
        %v2060 = vpop.permute.xlu0 %2059
        %2061 = vrot.lane.b32.xlu0 %v2001, 32
        %v2062 = vpop.permute.xlu0 %2061
        %2063 = vrot.lane.b32.xlu0 %v2002, 32
        %v2064 = vpop.permute.xlu0 %2063
        %2065 = vrot.lane.b32.xlu0 %v2003, 32
        %v2066 = vpop.permute.xlu0 %2065
        %2067 = vrot.lane.b32.xlu0 %v2004, 32
        %v2068 = vpop.permute.xlu0 %2067
        %2069 = vrot.lane.b32.xlu0 %v1973, 64
        %v2070 = vpop.permute.xlu0 %2069
        %2071 = vrot.lane.b32.xlu0 %v1974, 64
        %v2072 = vpop.permute.xlu0 %2071
        %2073 = vrot.lane.b32.xlu0 %v1975, 64
        %v2074 = vpop.permute.xlu0 %2073
        %2075 = vrot.lane.b32.xlu0 %v1976, 64
        %v2076 = vpop.permute.xlu0 %2075
        %2077 = vrot.lane.b32.xlu0 %v1977, 64
        %v2078 = vpop.permute.xlu0 %2077
        %2079 = vrot.lane.b32.xlu0 %v1978, 64
        %v2080 = vpop.permute.xlu0 %2079
        %2081 = vrot.lane.b32.xlu0 %v1979, 64
        %v2082 = vpop.permute.xlu0 %2081
        %2083 = vrot.lane.b32.xlu0 %v1980, 64
        %v2084 = vpop.permute.xlu0 %2083
        %2085 = vrot.lane.b32.xlu0 %v1981, 64
        %v2086 = vpop.permute.xlu0 %2085
        %2087 = vrot.lane.b32.xlu0 %v1982, 64
        %v2088 = vpop.permute.xlu0 %2087
        %2089 = vrot.lane.b32.xlu0 %v1983, 64
        %v2090 = vpop.permute.xlu0 %2089
        %2091 = vrot.lane.b32.xlu0 %v1984, 64
        %v2092 = vpop.permute.xlu0 %2091
        %2093 = vrot.lane.b32.xlu0 %v1985, 64
        %v2094 = vpop.permute.xlu0 %2093
        %2095 = vrot.lane.b32.xlu0 %v1986, 64
        %v2096 = vpop.permute.xlu0 %2095
        %2097 = vrot.lane.b32.xlu0 %v1987, 64
        %v2098 = vpop.permute.xlu0 %2097
        %2099 = vrot.lane.b32.xlu0 %v1988, 64
        %v2100 = vpop.permute.xlu0 %2099
        %2101 = vrot.lane.b32.xlu0 %v1989, 64
        %v2102 = vpop.permute.xlu0 %2101
        %2103 = vrot.lane.b32.xlu0 %v1990, 64
        %v2104 = vpop.permute.xlu0 %2103
        %2105 = vrot.lane.b32.xlu0 %v1991, 64
        %v2106 = vpop.permute.xlu0 %2105
        %2107 = vrot.lane.b32.xlu0 %v1992, 64
        %v2108 = vpop.permute.xlu0 %2107
        %2109 = vrot.lane.b32.xlu0 %v1993, 64
        %v2110 = vpop.permute.xlu0 %2109
        %2111 = vrot.lane.b32.xlu0 %v1994, 64
        %v2112 = vpop.permute.xlu0 %2111
        %2113 = vrot.lane.b32.xlu0 %v1995, 64
        %v2114 = vpop.permute.xlu0 %2113
        %2115 = vrot.lane.b32.xlu0 %v1996, 64
        %v2116 = vpop.permute.xlu0 %2115
        %2117 = vrot.lane.b32.xlu0 %v1997, 64
        %v2118 = vpop.permute.xlu0 %2117
        %2119 = vrot.lane.b32.xlu0 %v1998, 64
        %v2120 = vpop.permute.xlu0 %2119
        %2121 = vrot.lane.b32.xlu0 %v1999, 64
        %v2122 = vpop.permute.xlu0 %2121
        %2123 = vrot.lane.b32.xlu0 %v2000, 64
        %v2124 = vpop.permute.xlu0 %2123
        %2125 = vrot.lane.b32.xlu0 %v2001, 64
        %v2126 = vpop.permute.xlu0 %2125
        %2127 = vrot.lane.b32.xlu0 %v2002, 64
        %v2128 = vpop.permute.xlu0 %2127
        %2129 = vrot.lane.b32.xlu0 %v2003, 64
        %v2130 = vpop.permute.xlu0 %2129
        %2131 = vrot.lane.b32.xlu0 %v2004, 64
        %v2132 = vpop.permute.xlu0 %2131
        %2133 = vrot.lane.b32.xlu0 %v1973, 96
        %v2134 = vpop.permute.xlu0 %2133
        %2135 = vrot.lane.b32.xlu0 %v1974, 96
        %v2136 = vpop.permute.xlu0 %2135
        %2137 = vrot.lane.b32.xlu0 %v1975, 96
        %v2138 = vpop.permute.xlu0 %2137
        %2139 = vrot.lane.b32.xlu0 %v1976, 96
        %v2140 = vpop.permute.xlu0 %2139
        %2141 = vrot.lane.b32.xlu0 %v1977, 96
        %v2142 = vpop.permute.xlu0 %2141
        %2143 = vrot.lane.b32.xlu0 %v1978, 96
        %v2144 = vpop.permute.xlu0 %2143
        %2145 = vrot.lane.b32.xlu0 %v1979, 96
        %v2146 = vpop.permute.xlu0 %2145
        %2147 = vrot.lane.b32.xlu0 %v1980, 96
        %v2148 = vpop.permute.xlu0 %2147
        %2149 = vrot.lane.b32.xlu0 %v1981, 96
        %v2150 = vpop.permute.xlu0 %2149
        %2151 = vrot.lane.b32.xlu0 %v1982, 96
        %v2152 = vpop.permute.xlu0 %2151
        %2153 = vrot.lane.b32.xlu0 %v1983, 96
        %v2154 = vpop.permute.xlu0 %2153
        %2155 = vrot.lane.b32.xlu0 %v1984, 96
        %v2156 = vpop.permute.xlu0 %2155
        %2157 = vrot.lane.b32.xlu0 %v1985, 96
        %v2158 = vpop.permute.xlu0 %2157
        %2159 = vrot.lane.b32.xlu0 %v1986, 96
        %v2160 = vpop.permute.xlu0 %2159
        %2161 = vrot.lane.b32.xlu0 %v1987, 96
        %v2162 = vpop.permute.xlu0 %2161
        %2163 = vrot.lane.b32.xlu0 %v1988, 96
        %v2164 = vpop.permute.xlu0 %2163
        %2165 = vrot.lane.b32.xlu0 %v1989, 96
        %v2166 = vpop.permute.xlu0 %2165
        %2167 = vrot.lane.b32.xlu0 %v1990, 96
        %v2168 = vpop.permute.xlu0 %2167
        %2169 = vrot.lane.b32.xlu0 %v1991, 96
        %v2170 = vpop.permute.xlu0 %2169
        %2171 = vrot.lane.b32.xlu0 %v1992, 96
        %v2172 = vpop.permute.xlu0 %2171
        %2173 = vrot.lane.b32.xlu0 %v1993, 96
        %v2174 = vpop.permute.xlu0 %2173
        %2175 = vrot.lane.b32.xlu0 %v1994, 96
        %v2176 = vpop.permute.xlu0 %2175
        %2177 = vrot.lane.b32.xlu0 %v1995, 96
        %v2178 = vpop.permute.xlu0 %2177
        %2179 = vrot.lane.b32.xlu0 %v1996, 96
        %v2180 = vpop.permute.xlu0 %2179
        %2181 = vrot.lane.b32.xlu0 %v1997, 96
        %v2182 = vpop.permute.xlu0 %2181
        %2183 = vrot.lane.b32.xlu0 %v1998, 96
        %v2184 = vpop.permute.xlu0 %2183
        %2185 = vrot.lane.b32.xlu0 %v1999, 96
        %v2186 = vpop.permute.xlu0 %2185
        %2187 = vrot.lane.b32.xlu0 %v2000, 96
        %v2188 = vpop.permute.xlu0 %2187
        %2189 = vrot.lane.b32.xlu0 %v2001, 96
        %v2190 = vpop.permute.xlu0 %2189
        %2191 = vrot.lane.b32.xlu0 %v2002, 96
        %v2192 = vpop.permute.xlu0 %2191
        %2193 = vrot.lane.b32.xlu0 %v2003, 96
        %v2194 = vpop.permute.xlu0 %2193
        %2195 = vrot.lane.b32.xlu0 %v2004, 96
        %v2196 = vpop.permute.xlu0 %2195
        %v2197 = vsel %vm1866, %v1973, %v2006
        %v2198 = vsel %vm1866, %v1974, %v2008
        %v2199 = vsel %vm1866, %v1975, %v2010
        %v2200 = vsel %vm1866, %v1976, %v2012
        %v2201 = vsel %vm1866, %v1977, %v2014
        %v2202 = vsel %vm1866, %v1978, %v2016
        %v2203 = vsel %vm1866, %v1979, %v2018
        %v2204 = vsel %vm1866, %v1980, %v2020
        %v2205 = vsel %vm1866, %v1981, %v2022
        %v2206 = vsel %vm1866, %v1982, %v2024
        %v2207 = vsel %vm1866, %v1983, %v2026
        %v2208 = vsel %vm1866, %v1984, %v2028
        %v2209 = vsel %vm1866, %v1985, %v2030
        %v2210 = vsel %vm1866, %v1986, %v2032
        %v2211 = vsel %vm1866, %v1987, %v2034
        %v2212 = vsel %vm1866, %v1988, %v2036
        %v2213 = vsel %vm1866, %v1989, %v2038
        %v2214 = vsel %vm1866, %v1990, %v2040
        %v2215 = vsel %vm1866, %v1991, %v2042
        %v2216 = vsel %vm1866, %v1992, %v2044
        %v2217 = vsel %vm1866, %v1993, %v2046
        %v2218 = vsel %vm1866, %v1994, %v2048
        %v2219 = vsel %vm1866, %v1995, %v2050
        %v2220 = vsel %vm1866, %v1996, %v2052
        %v2221 = vsel %vm1866, %v1997, %v2054
        %v2222 = vsel %vm1866, %v1998, %v2056
        %v2223 = vsel %vm1866, %v1999, %v2058
        %v2224 = vsel %vm1866, %v2000, %v2060
        %v2225 = vsel %vm1866, %v2001, %v2062
        %v2226 = vsel %vm1866, %v2002, %v2064
        %v2227 = vsel %vm1866, %v2003, %v2066
        %v2228 = vsel %vm1866, %v2004, %v2068
        %v2229 = vsel %vm1899, %v2197, %v2070
        %v2230 = vsel %vm1899, %v2198, %v2072
        %v2231 = vsel %vm1899, %v2199, %v2074
        %v2232 = vsel %vm1899, %v2200, %v2076
        %v2233 = vsel %vm1899, %v2201, %v2078
        %v2234 = vsel %vm1899, %v2202, %v2080
        %v2235 = vsel %vm1899, %v2203, %v2082
        %v2236 = vsel %vm1899, %v2204, %v2084
        %v2237 = vsel %vm1899, %v2205, %v2086
        %v2238 = vsel %vm1899, %v2206, %v2088
        %v2239 = vsel %vm1899, %v2207, %v2090
        %v2240 = vsel %vm1899, %v2208, %v2092
        %v2241 = vsel %vm1899, %v2209, %v2094
        %v2242 = vsel %vm1899, %v2210, %v2096
        %v2243 = vsel %vm1899, %v2211, %v2098
        %v2244 = vsel %vm1899, %v2212, %v2100
        %v2245 = vsel %vm1899, %v2213, %v2102
        %v2246 = vsel %vm1899, %v2214, %v2104
        %v2247 = vsel %vm1899, %v2215, %v2106
        %v2248 = vsel %vm1899, %v2216, %v2108
        %v2249 = vsel %vm1899, %v2217, %v2110
        %v2250 = vsel %vm1899, %v2218, %v2112
        %v2251 = vsel %vm1899, %v2219, %v2114
        %v2252 = vsel %vm1899, %v2220, %v2116
        %v2253 = vsel %vm1899, %v2221, %v2118
        %v2254 = vsel %vm1899, %v2222, %v2120
        %v2255 = vsel %vm1899, %v2223, %v2122
        %v2256 = vsel %vm1899, %v2224, %v2124
        %v2257 = vsel %vm1899, %v2225, %v2126
        %v2258 = vsel %vm1899, %v2226, %v2128
        %v2259 = vsel %vm1899, %v2227, %v2130
        %v2260 = vsel %vm1899, %v2228, %v2132
        %v2261 = vsel %vm1932, %v2229, %v2134
        %v2262 = vsel %vm1932, %v2230, %v2136
        %v2263 = vsel %vm1932, %v2231, %v2138
        %v2264 = vsel %vm1932, %v2232, %v2140
        %v2265 = vsel %vm1932, %v2233, %v2142
        %v2266 = vsel %vm1932, %v2234, %v2144
        %v2267 = vsel %vm1932, %v2235, %v2146
        %v2268 = vsel %vm1932, %v2236, %v2148
        %v2269 = vsel %vm1932, %v2237, %v2150
        %v2270 = vsel %vm1932, %v2238, %v2152
        %v2271 = vsel %vm1932, %v2239, %v2154
        %v2272 = vsel %vm1932, %v2240, %v2156
        %v2273 = vsel %vm1932, %v2241, %v2158
        %v2274 = vsel %vm1932, %v2242, %v2160
        %v2275 = vsel %vm1932, %v2243, %v2162
        %v2276 = vsel %vm1932, %v2244, %v2164
        %v2277 = vsel %vm1932, %v2245, %v2166
        %v2278 = vsel %vm1932, %v2246, %v2168
        %v2279 = vsel %vm1932, %v2247, %v2170
        %v2280 = vsel %vm1932, %v2248, %v2172
        %v2281 = vsel %vm1932, %v2249, %v2174
        %v2282 = vsel %vm1932, %v2250, %v2176
        %v2283 = vsel %vm1932, %v2251, %v2178
        %v2284 = vsel %vm1932, %v2252, %v2180
        %v2285 = vsel %vm1932, %v2253, %v2182
        %v2286 = vsel %vm1932, %v2254, %v2184
        %v2287 = vsel %vm1932, %v2255, %v2186
        %v2288 = vsel %vm1932, %v2256, %v2188
        %v2289 = vsel %vm1932, %v2257, %v2190
        %v2290 = vsel %vm1932, %v2258, %v2192
        %v2291 = vsel %vm1932, %v2259, %v2194
        %v2292 = vsel %vm1932, %v2260, %v2196
        %v2293 = vld [vmem:[%s2] sm:$0x1]
        %v2294 = vlaneseq
        %v2295 = vshrl.u32 %v2294, 7
        %v2296 = vsub.s32 0, %v2295
        %v2297 = vrot.slane %v2293, %v2296
        %vm2298 = vcmp.eq.s32.totalorder %v2261, %v2297
        %vm2299 = vcmp.eq.s32.totalorder %v2262, %v2297
        %vm2300 = vcmp.eq.s32.totalorder %v2263, %v2297
        %vm2301 = vcmp.eq.s32.totalorder %v2264, %v2297
        %vm2302 = vcmp.eq.s32.totalorder %v2265, %v2297
        %vm2303 = vcmp.eq.s32.totalorder %v2266, %v2297
        %vm2304 = vcmp.eq.s32.totalorder %v2267, %v2297
        %vm2305 = vcmp.eq.s32.totalorder %v2268, %v2297
        %vm2306 = vcmp.eq.s32.totalorder %v2269, %v2297
        %vm2307 = vcmp.eq.s32.totalorder %v2270, %v2297
        %vm2308 = vcmp.eq.s32.totalorder %v2271, %v2297
        %vm2309 = vcmp.eq.s32.totalorder %v2272, %v2297
        %vm2310 = vcmp.eq.s32.totalorder %v2273, %v2297
        %vm2311 = vcmp.eq.s32.totalorder %v2274, %v2297
        %vm2312 = vcmp.eq.s32.totalorder %v2275, %v2297
        %vm2313 = vcmp.eq.s32.totalorder %v2276, %v2297
        %vm2314 = vcmp.eq.s32.totalorder %v2277, %v2297
        %vm2315 = vcmp.eq.s32.totalorder %v2278, %v2297
        %vm2316 = vcmp.eq.s32.totalorder %v2279, %v2297
        %vm2317 = vcmp.eq.s32.totalorder %v2280, %v2297
        %vm2318 = vcmp.eq.s32.totalorder %v2281, %v2297
        %vm2319 = vcmp.eq.s32.totalorder %v2282, %v2297
        %vm2320 = vcmp.eq.s32.totalorder %v2283, %v2297
        %vm2321 = vcmp.eq.s32.totalorder %v2284, %v2297
        %vm2322 = vcmp.eq.s32.totalorder %v2285, %v2297
        %vm2323 = vcmp.eq.s32.totalorder %v2286, %v2297
        %vm2324 = vcmp.eq.s32.totalorder %v2287, %v2297
        %vm2325 = vcmp.eq.s32.totalorder %v2288, %v2297
        %vm2326 = vcmp.eq.s32.totalorder %v2289, %v2297
        %vm2327 = vcmp.eq.s32.totalorder %v2290, %v2297
        %vm2328 = vcmp.eq.s32.totalorder %v2291, %v2297
        %vm2329 = vcmp.eq.s32.totalorder %v2292, %v2297
        %v2330 = vsel %vm2298, %v1933, 0.0
        %v2331 = vsel %vm2299, %v1934, 0.0
        %v2332 = vsel %vm2300, %v1935, 0.0
        %v2333 = vsel %vm2301, %v1936, 0.0
        %v2334 = vsel %vm2302, %v1937, 0.0
        %v2335 = vsel %vm2303, %v1938, 0.0
        %v2336 = vsel %vm2304, %v1939, 0.0
        %v2337 = vsel %vm2305, %v1940, 0.0
        %v2338 = vsel %vm2306, %v1941, 0.0
        %v2339 = vsel %vm2307, %v1942, 0.0
        %v2340 = vsel %vm2308, %v1943, 0.0
        %v2341 = vsel %vm2309, %v1944, 0.0
        %v2342 = vsel %vm2310, %v1945, 0.0
        %v2343 = vsel %vm2311, %v1946, 0.0
        %v2344 = vsel %vm2312, %v1947, 0.0
        %v2345 = vsel %vm2313, %v1948, 0.0
        %v2346 = vsel %vm2314, %v1949, 0.0
        %v2347 = vsel %vm2315, %v1950, 0.0
        %v2348 = vsel %vm2316, %v1951, 0.0
        %v2349 = vsel %vm2317, %v1952, 0.0
        %v2350 = vsel %vm2318, %v1953, 0.0
        %v2351 = vsel %vm2319, %v1954, 0.0
        %v2352 = vsel %vm2320, %v1955, 0.0
        %v2353 = vsel %vm2321, %v1956, 0.0
        %v2354 = vsel %vm2322, %v1957, 0.0
        %v2355 = vsel %vm2323, %v1958, 0.0
        %v2356 = vsel %vm2324, %v1959, 0.0
        %v2357 = vsel %vm2325, %v1960, 0.0
        %v2358 = vsel %vm2326, %v1961, 0.0
        %v2359 = vsel %vm2327, %v1962, 0.0
        %v2360 = vsel %vm2328, %v1963, 0.0
        %v2361 = vsel %vm2329, %v1964, 0.0
        %v2362 = vadd.f32 %v2330, %v1324
        %v2363 = vadd.f32 %v2331, %v1327
        %v2364 = vadd.f32 %v2332, %v1332
        %v2365 = vadd.f32 %v2333, %v1335
        %v2366 = vadd.f32 %v2334, %v1340
        %v2367 = vadd.f32 %v2335, %v1343
        %v2368 = vadd.f32 %v2336, %v1348
        %v2369 = vadd.f32 %v2337, %v1351
        %v2370 = vadd.f32 %v2338, %v1356
        %v2371 = vadd.f32 %v2339, %v1359
        %v2372 = vadd.f32 %v2340, %v1364
        %v2373 = vadd.f32 %v2341, %v1367
        %v2374 = vadd.f32 %v2342, %v1372
        %v2375 = vadd.f32 %v2343, %v1375
        %v2376 = vadd.f32 %v2344, %v1380
        %v2377 = vadd.f32 %v2345, %v1383
        %v2378 = vadd.f32 %v2346, %v1388
        %v2379 = vadd.f32 %v2347, %v1391
        %v2380 = vadd.f32 %v2348, %v1396
        %v2381 = vadd.f32 %v2349, %v1399
        %v2382 = vadd.f32 %v2350, %v1404
        %v2383 = vadd.f32 %v2351, %v1407
        %v2384 = vadd.f32 %v2352, %v1412
        %v2385 = vadd.f32 %v2353, %v1415
        %v2386 = vadd.f32 %v2354, %v1420
        %v2387 = vadd.f32 %v2355, %v1423
        %v2388 = vadd.f32 %v2356, %v1428
        %v2389 = vadd.f32 %v2357, %v1431
        %v2390 = vadd.f32 %v2358, %v1436
        %v2391 = vadd.f32 %v2359, %v1439
        %v2392 = vadd.f32 %v2360, %v1444
        %v2393 = vadd.f32 %v2361, %v1447
        %vm2394 = vcmp.ge.f32.partialorder %v2362, 0.0
        %vm2395 = vcmp.ge.f32.partialorder %v2363, 0.0
        %vm2396 = vcmp.ge.f32.partialorder %v2364, 0.0
        %vm2397 = vcmp.ge.f32.partialorder %v2365, 0.0
        %vm2398 = vcmp.ge.f32.partialorder %v2366, 0.0
        %vm2399 = vcmp.ge.f32.partialorder %v2367, 0.0
        %vm2400 = vcmp.ge.f32.partialorder %v2368, 0.0
        %vm2401 = vcmp.ge.f32.partialorder %v2369, 0.0
        %vm2402 = vcmp.ge.f32.partialorder %v2370, 0.0
        %vm2403 = vcmp.ge.f32.partialorder %v2371, 0.0
        %vm2404 = vcmp.ge.f32.partialorder %v2372, 0.0
        %vm2405 = vcmp.ge.f32.partialorder %v2373, 0.0
        %vm2406 = vcmp.ge.f32.partialorder %v2374, 0.0
        %vm2407 = vcmp.ge.f32.partialorder %v2375, 0.0
        %vm2408 = vcmp.ge.f32.partialorder %v2376, 0.0
        %vm2409 = vcmp.ge.f32.partialorder %v2377, 0.0
        %vm2410 = vcmp.ge.f32.partialorder %v2378, 0.0
        %vm2411 = vcmp.ge.f32.partialorder %v2379, 0.0
        %vm2412 = vcmp.ge.f32.partialorder %v2380, 0.0
        %vm2413 = vcmp.ge.f32.partialorder %v2381, 0.0
        %vm2414 = vcmp.ge.f32.partialorder %v2382, 0.0
        %vm2415 = vcmp.ge.f32.partialorder %v2383, 0.0
        %vm2416 = vcmp.ge.f32.partialorder %v2384, 0.0
        %vm2417 = vcmp.ge.f32.partialorder %v2385, 0.0
        %vm2418 = vcmp.ge.f32.partialorder %v2386, 0.0
        %vm2419 = vcmp.ge.f32.partialorder %v2387, 0.0
        %vm2420 = vcmp.ge.f32.partialorder %v2388, 0.0
        %vm2421 = vcmp.ge.f32.partialorder %v2389, 0.0
        %vm2422 = vcmp.ge.f32.partialorder %v2390, 0.0
        %vm2423 = vcmp.ge.f32.partialorder %v2391, 0.0
        %vm2424 = vcmp.ge.f32.partialorder %v2392, 0.0
        %vm2425 = vcmp.ge.f32.partialorder %v2393, 0.0
        %v2426 = vstv %s442
        %v2427 = vmul.f32 %v2426, %v2362
        %v2428 = vmul.f32 %v2426, %v2363
        %v2429 = vmul.f32 %v2426, %v2364
        %v2430 = vmul.f32 %v2426, %v2365
        %v2431 = vmul.f32 %v2426, %v2366
        %v2432 = vmul.f32 %v2426, %v2367
        %v2433 = vmul.f32 %v2426, %v2368
        %v2434 = vmul.f32 %v2426, %v2369
        %v2435 = vmul.f32 %v2426, %v2370
        %v2436 = vmul.f32 %v2426, %v2371
        %v2437 = vmul.f32 %v2426, %v2372
        %v2438 = vmul.f32 %v2426, %v2373
        %v2439 = vmul.f32 %v2426, %v2374
        %v2440 = vmul.f32 %v2426, %v2375
        %v2441 = vmul.f32 %v2426, %v2376
        %v2442 = vmul.f32 %v2426, %v2377
        %v2443 = vmul.f32 %v2426, %v2378
        %v2444 = vmul.f32 %v2426, %v2379
        %v2445 = vmul.f32 %v2426, %v2380
        %v2446 = vmul.f32 %v2426, %v2381
        %v2447 = vmul.f32 %v2426, %v2382
        %v2448 = vmul.f32 %v2426, %v2383
        %v2449 = vmul.f32 %v2426, %v2384
        %v2450 = vmul.f32 %v2426, %v2385
        %v2451 = vmul.f32 %v2426, %v2386
        %v2452 = vmul.f32 %v2426, %v2387
        %v2453 = vmul.f32 %v2426, %v2388
        %v2454 = vmul.f32 %v2426, %v2389
        %v2455 = vmul.f32 %v2426, %v2390
        %v2456 = vmul.f32 %v2426, %v2391
        %v2457 = vmul.f32 %v2426, %v2392
        %v2458 = vmul.f32 %v2426, %v2393
        %v2459 = vsel %vm2394, %v2362, %v2427
        %v2460 = vsel %vm2395, %v2363, %v2428
        %v2461 = vsel %vm2396, %v2364, %v2429
        %v2462 = vsel %vm2397, %v2365, %v2430
        %v2463 = vsel %vm2398, %v2366, %v2431
        %v2464 = vsel %vm2399, %v2367, %v2432
        %v2465 = vsel %vm2400, %v2368, %v2433
        %v2466 = vsel %vm2401, %v2369, %v2434
        %v2467 = vsel %vm2402, %v2370, %v2435
        %v2468 = vsel %vm2403, %v2371, %v2436
        %v2469 = vsel %vm2404, %v2372, %v2437
        %v2470 = vsel %vm2405, %v2373, %v2438
        %v2471 = vsel %vm2406, %v2374, %v2439
        %v2472 = vsel %vm2407, %v2375, %v2440
        %v2473 = vsel %vm2408, %v2376, %v2441
        %v2474 = vsel %vm2409, %v2377, %v2442
        %v2475 = vsel %vm2410, %v2378, %v2443
        %v2476 = vsel %vm2411, %v2379, %v2444
        %v2477 = vsel %vm2412, %v2380, %v2445
        %v2478 = vsel %vm2413, %v2381, %v2446
        %v2479 = vsel %vm2414, %v2382, %v2447
        %v2480 = vsel %vm2415, %v2383, %v2448
        %v2481 = vsel %vm2416, %v2384, %v2449
        %v2482 = vsel %vm2417, %v2385, %v2450
        %v2483 = vsel %vm2418, %v2386, %v2451
        %v2484 = vsel %vm2419, %v2387, %v2452
        %v2485 = vsel %vm2420, %v2388, %v2453
        %v2486 = vsel %vm2421, %v2389, %v2454
        %v2487 = vsel %vm2422, %v2390, %v2455
        %v2488 = vsel %vm2423, %v2391, %v2456
        %v2489 = vsel %vm2424, %v2392, %v2457
        %v2490 = vsel %vm2425, %v2393, %v2458
        %v2491 = vpack.c.bf16 %v2460, %v2459
        %v2492 = vpack.c.bf16 %v2462, %v2461
        %v2493 = vpack.c.bf16 %v2464, %v2463
        %v2494 = vpack.c.bf16 %v2466, %v2465
        %v2495 = vpack.c.bf16 %v2468, %v2467
        %v2496 = vpack.c.bf16 %v2470, %v2469
        %v2497 = vpack.c.bf16 %v2472, %v2471
        %v2498 = vpack.c.bf16 %v2474, %v2473
        %v2499 = vpack.c.bf16 %v2476, %v2475
        %v2500 = vpack.c.bf16 %v2478, %v2477
        %v2501 = vpack.c.bf16 %v2480, %v2479
        %v2502 = vpack.c.bf16 %v2482, %v2481
        %v2503 = vpack.c.bf16 %v2484, %v2483
        %v2504 = vpack.c.bf16 %v2486, %v2485
        %v2505 = vpack.c.bf16 %v2488, %v2487
        %v2506 = vpack.c.bf16 %v2490, %v2489
        %v2523 = vunpack.c.l.b16 %v2491
        %v2524 = vunpack.c.h.b16 %v2491
        %v2525 = vunpack.c.l.b16 %v2492
        %v2526 = vunpack.c.h.b16 %v2492
        %v2527 = vunpack.c.l.b16 %v2493
        %v2528 = vunpack.c.h.b16 %v2493
        %v2529 = vunpack.c.l.b16 %v2494
        %v2530 = vunpack.c.h.b16 %v2494
        %v2531 = vunpack.c.l.b16 %v2495
        %v2532 = vunpack.c.h.b16 %v2495
        %v2533 = vunpack.c.l.b16 %v2496
        %v2534 = vunpack.c.h.b16 %v2496
        %v2535 = vunpack.c.l.b16 %v2497
        %v2536 = vunpack.c.h.b16 %v2497
        %v2537 = vunpack.c.l.b16 %v2498
        %v2538 = vunpack.c.h.b16 %v2498
        %v2539 = vunpack.c.l.b16 %v2499
        %v2540 = vunpack.c.h.b16 %v2499
        %v2541 = vunpack.c.l.b16 %v2500
        %v2542 = vunpack.c.h.b16 %v2500
        %v2543 = vunpack.c.l.b16 %v2501
        %v2544 = vunpack.c.h.b16 %v2501
        %v2545 = vunpack.c.l.b16 %v2502
        %v2546 = vunpack.c.h.b16 %v2502
        %v2547 = vunpack.c.l.b16 %v2503
        %v2548 = vunpack.c.h.b16 %v2503
        %v2549 = vunpack.c.l.b16 %v2504
        %v2550 = vunpack.c.h.b16 %v2504
        %v2551 = vunpack.c.l.b16 %v2505
        %v2552 = vunpack.c.h.b16 %v2505
        %v2553 = vunpack.c.l.b16 %v2506
        %v2554 = vunpack.c.h.b16 %v2506
        %v2555 = vpack.c.b16 %v2523, %v2523
        %v2556 = vpack.c.b16 %v2524, %v2524
        %v2557 = vpack.c.b16 %v2525, %v2525
        %v2558 = vpack.c.b16 %v2526, %v2526
        %v2559 = vpack.c.b16 %v2527, %v2527
        %v2560 = vpack.c.b16 %v2528, %v2528
        %v2561 = vpack.c.b16 %v2529, %v2529
        %v2562 = vpack.c.b16 %v2530, %v2530
        %v2563 = vpack.c.b16 %v2531, %v2531
        %v2564 = vpack.c.b16 %v2532, %v2532
        %v2565 = vpack.c.b16 %v2533, %v2533
        %v2566 = vpack.c.b16 %v2534, %v2534
        %v2567 = vpack.c.b16 %v2535, %v2535
        %v2568 = vpack.c.b16 %v2536, %v2536
        %v2569 = vpack.c.b16 %v2537, %v2537
        %v2570 = vpack.c.b16 %v2538, %v2538
        %v2571 = vpack.c.b16 %v2539, %v2539
        %v2572 = vpack.c.b16 %v2540, %v2540
        %v2573 = vpack.c.b16 %v2541, %v2541
        %v2574 = vpack.c.b16 %v2542, %v2542
        %v2575 = vpack.c.b16 %v2543, %v2543
        %v2576 = vpack.c.b16 %v2544, %v2544
        %v2577 = vpack.c.b16 %v2545, %v2545
        %v2578 = vpack.c.b16 %v2546, %v2546
        %v2579 = vpack.c.b16 %v2547, %v2547
        %v2580 = vpack.c.b16 %v2548, %v2548
        %v2581 = vpack.c.b16 %v2549, %v2549
        %v2582 = vpack.c.b16 %v2550, %v2550
        %v2583 = vpack.c.b16 %v2551, %v2551
        %v2584 = vpack.c.b16 %v2552, %v2552
        %v2585 = vpack.c.b16 %v2553, %v2553
        %v2586 = vpack.c.b16 %v2554, %v2554
        %2619 = vst [vmem:[%s417] sm:$0xf] %v2555
        %2620 = vst [vmem:[%s417 + $0x4] sm:$0xf] %v2556
        %2621 = vst [vmem:[%s417 + $0x8] sm:$0xf] %v2557
        %2622 = vst [vmem:[%s417 + $0xc] sm:$0xf] %v2558
        %2623 = vst [vmem:[%s417 + $0x10] sm:$0xf] %v2559
        %2624 = vst [vmem:[%s417 + $0x14] sm:$0xf] %v2560
        %2625 = vst [vmem:[%s417 + $0x18] sm:$0xf] %v2561
        %2626 = vst [vmem:[%s417 + $0x1c] sm:$0xf] %v2562
        %2627 = vst [vmem:[%s417 + $0x20] sm:$0xf] %v2563
        %2628 = vst [vmem:[%s417 + $0x24] sm:$0xf] %v2564
        %2629 = vst [vmem:[%s417 + $0x28] sm:$0xf] %v2565
        %2630 = vst [vmem:[%s417 + $0x2c] sm:$0xf] %v2566
        %2631 = vst [vmem:[%s417 + $0x30] sm:$0xf] %v2567
        %2632 = vst [vmem:[%s417 + $0x34] sm:$0xf] %v2568
        %2633 = vst [vmem:[%s417 + $0x38] sm:$0xf] %v2569
        %2634 = vst [vmem:[%s417 + $0x3c] sm:$0xf] %v2570
        %2635 = vst [vmem:[%s417 + $0x40] sm:$0xf] %v2571
        %2636 = vst [vmem:[%s417 + $0x44] sm:$0xf] %v2572
        %2637 = vst [vmem:[%s417 + $0x48] sm:$0xf] %v2573
        %2638 = vst [vmem:[%s417 + $0x4c] sm:$0xf] %v2574
        %2639 = vst [vmem:[%s417 + $0x50] sm:$0xf] %v2575
        %2640 = vst [vmem:[%s417 + $0x54] sm:$0xf] %v2576
        %2641 = vst [vmem:[%s417 + $0x58] sm:$0xf] %v2577
        %2642 = vst [vmem:[%s417 + $0x5c] sm:$0xf] %v2578
        %2643 = vst [vmem:[%s417 + $0x60] sm:$0xf] %v2579
        %2644 = vst [vmem:[%s417 + $0x64] sm:$0xf] %v2580
        %2645 = vst [vmem:[%s417 + $0x68] sm:$0xf] %v2581
        %2646 = vst [vmem:[%s417 + $0x6c] sm:$0xf] %v2582
        %2647 = vst [vmem:[%s417 + $0x70] sm:$0xf] %v2583
        %2648 = vst [vmem:[%s417 + $0x74] sm:$0xf] %v2584
        %2649 = vst [vmem:[%s417 + $0x78] sm:$0xf] %v2585
        %2650 = vst [vmem:[%s417 + $0x7c] sm:$0xf] %v2586
        %s2651 = sand.u32 %s271, 1
        %s2652 = scalar_lea.sflag [#allocation3], %s2651
        %s2653 = sand.u32 %s271, 1
        %s2654 = smul.addr %s2653, 128
        %s2655 = scalar_lea.vmem [#allocation5], %s2654
        // Predicated region
        $region65: #{tpu_custom_call.1} parent=59 // pred_check
          %p2656 = pneg %p281
        $region66: #{tpu_custom_call.1} parent=59 // pred_check_branch
          %2658 = sbr.rel (%p2656) target = $region68
        $region67: #{tpu_custom_call.1} parent=59 // pred_region
          %s2659 = smul.u32 32, %s30
          %s2661 = ssub.s32 2048, 2048
          %2662 = vsyncadd %s2652, %s2661
          %s2663 = smul.addr %s29, 32
          %s2664 = sadd.s32 %s2659, %s2663
          %s2665 = smul.addr %s2664, 64
          %s2666 = scalar_lea.hbm %s10, %s2665
          %s2667 = sshll.u32 %s2655, 4
          %s2668 = int_to_ptr.vmem [resolvable:$true] %s2667
          %2673 = dma.vmem_to_hbm [thread:$0]  %s2668, 2048, %s2666, %s2652, 64, 64, 4
        $region68: #{tpu_custom_call.1} parent=59 // pred_fallthru
          _
      $region60: #{tpu_custom_call.1} parent=5 // pred_fallthru
        _
      %p2674 = scmp.le.s32.totalorder 2, %s20
      // Predicated region
      $region69: #{tpu_custom_call.1} parent=5 // pred_check
        %p2675 = pneg %p2674
      $region70: #{tpu_custom_call.1} parent=5 // pred_check_branch
        %2677 = sbr.rel (%p2675) target = $region72
      $region71: #{tpu_custom_call.1} parent=5 // pred_region
        %s2678 = ssub.s32 %s20, 2
        // Predicated region
        $region73: #{tpu_custom_call.1} parent=71 // pred_check
          %p2679 = pneg %p287
        $region74: #{tpu_custom_call.1} parent=71 // pred_check_branch
          %2681 = sbr.rel (%p2679) target = $region76
        $region75: #{tpu_custom_call.1} parent=71 // pred_region
          %s2682 = sand.u32 %s272, 1
          %s2683 = scalar_lea.sflag [#allocation3], %s2682
          %s2684 = sand.u32 %s272, 1
          %s2685 = smul.addr %s2684, 128
          %s2686 = scalar_lea.vmem [#allocation5], %s2685
          %2687 = dma.done %s2683, 2048
        $region76: #{tpu_custom_call.1} parent=71 // pred_fallthru
          _
      $region72: #{tpu_custom_call.1} parent=5 // pred_fallthru
        _
    $region6: #{tpu_custom_call.1} parent=1 // loop_footer
      %s24 = sadd.s32 1, %s20
    $region7: #{tpu_custom_call.1} parent=1 // loop_footer_branch
      %19 = sbr.rel target = $region3
    $region8: #{tpu_custom_call.1} parent=1 // loop_exit
      _
    %2688 = vsyncpa [#allocation3], 1
    %s2689 = scalar_lea.sflag [#allocation3], 1
    %2690 = vsyncpa %s2689, 1
    %2691 = vsyncpa [#allocation4], 1
    %s2692 = scalar_lea.sflag [#allocation4], 1
    %2693 = vsyncpa %s2692, 1

</llo_original>
